<compile_context>
chip_gen: v6e
topology: v6e:2x2x1
jax: 0.10.0
libtpu: 0.0.40
codegen_flags: <defaults>
</compile_context>

<pallas_src>
import functools
import math

import jax
import jax.numpy as jnp
from jax.experimental import pallas as pl
from jax.experimental.pallas import tpu as pltpu

_HALO = 128  # lane-tile-aligned halo; only needs >= W + 1


def _gelu_exact(x):
    # nn.GELU() default = exact erf-based GELU
    return 0.5 * x * (1.0 + jax.scipy.special.erf(x * (1.0 / math.sqrt(2.0))))


def residual_block_kernel(x_ref, w1_ref, t1_ref, w2_ref, t2_ref, o_ref,
                          pad_ref, col_ref, *, H, W, NC):
    """Whole batch in one step, lane-dense sublane-stacked (N*C, H*W) layout.

    x_ref  : (NC, H*W)              flattened NCHW input (images stacked on sublanes)
    w*_ref : (NC, 9*NC)             block-diagonal folded conv weights (BN scale absorbed)
    t*_ref : (NC, 1)                folded shift = s*b + beta - s*mean (BN eval + bias)
    o_ref  : (NC, H*W)              output
    pad_ref: (NC, H*W + 2*_HALO)    flat slab with lane-aligned zero halo (VMEM scratch)
    col_ref: (9*NC, H*W)            im2col matrix scratch (VMEM), 8-row-aligned tap blocks
    """
    HW = H * W
    P = _HALO

    x = x_ref[...]                                  # (NC, HW), lane-dense

    # Zero only the halo columns (interior is fully overwritten by each build).
    # Lane-aligned full-tile stores since P is a multiple of 128.
    pad_ref[:, :P] = jnp.zeros((NC, P), jnp.float32)
    pad_ref[:, P + HW:] = jnp.zeros((NC, P), jnp.float32)

    # Column-validity masks for the horizontally shifted taps (w-1 / w+1 wrap-around).
    lane = jax.lax.broadcasted_iota(jnp.int32, (NC, HW), 1)
    col = lane % W
    not_first_col = col != 0
    not_last_col = col != (W - 1)

    def build_im2col(z):
        """z: (NC, HW) -> (9*NC, HW) im2col matrix, tap-major rows t*NC + (n*C + c)."""
        pad_ref[:, P:P + HW] = z                    # lane-aligned interior store
        for dy in range(3):
            for dx in range(3):
                off = (dy - 1) * W + (dx - 1)           # flat-index shift of the tap
                tap = pad_ref[:, P + off:P + off + HW]  # vertical OOB falls in zero halo
                if dx == 0:                              # reads column w-1
                    tap = jnp.where(not_first_col, tap, 0.0)
                elif dx == 2:                            # reads column w+1
                    tap = jnp.where(not_last_col, tap, 0.0)
                t = dy * 3 + dx
                # NC == 8 -> sublane-tile aligned, unmasked 8-row store.
                col_ref[t * NC:(t + 1) * NC, :] = tap
        return col_ref[...]

    # ---- conv1 + bn1 (folded) + GELU : one MXU matmul for the whole batch ----
    h = _gelu_exact(
        jnp.dot(w1_ref[...], build_im2col(x),
                preferred_element_type=jnp.float32,
                precision=jax.lax.Precision.HIGHEST)
        + t1_ref[...])

    # ---- conv2 + bn2 (folded) ----
    y = (jnp.dot(w2_ref[...], build_im2col(h),
                 preferred_element_type=jnp.float32,
                 precision=jax.lax.Precision.HIGHEST)
         + t2_ref[...])

    # ---- residual add (pad_flag=True -> identity = x) + GELU ----
    o_ref[...] = _gelu_exact(y + x)


def residual_block_forward(x_nchw, kernel_params):
    """pad_flag=True, downsample=False ResidualBlock forward. x_nchw: (N, C, H, W) f32."""
    w1f, t1, w2f, t2 = kernel_params
    N, C, H, W = x_nchw.shape
    NC, HW = N * C, H * W
    assert W + 1 <= _HALO, "halo must cover the max flat tap shift"

    x_flat = x_nchw.reshape(NC, HW)                 # free reshape, stays NCHW ordering

    wgt_spec = pl.BlockSpec((NC, 9 * NC), lambda i: (0, 0))
    sft_spec = pl.BlockSpec((NC, 1), lambda i: (0, 0))
    img_spec = pl.BlockSpec((NC, HW), lambda i: (0, 0))

    out_flat = pl.pallas_call(
        functools.partial(residual_block_kernel, H=H, W=W, NC=NC),
        out_shape=jax.ShapeDtypeStruct((NC, HW), jnp.float32),
        grid_spec=pltpu.PrefetchScalarGridSpec(
            num_scalar_prefetch=0,
            grid=(1,),
            in_specs=[img_spec, wgt_spec, sft_spec, wgt_spec, sft_spec],
            out_specs=img_spec,
            scratch_shapes=[
                pltpu.VMEM((NC, HW + 2 * _HALO), jnp.float32),   # flat padded slab
                pltpu.VMEM((9 * NC, HW), jnp.float32),           # im2col matrix
            ],
        ),
        compiler_params=pltpu.CompilerParams(dimension_semantics=("arbitrary",)),
    )(x_flat, w1f, t1, w2f, t2)

    return out_flat.reshape(N, C, H, W)


def pack_conv_bn(w_oihw, b, gamma, beta, mean, var, n_batch, eps=1e-5):
    """Fold conv bias + eval BN into a block-diagonal (N*C_out, 9*N*C_in) weight matrix
    (tap-major column blocks, matching the kernel's im2col row order) and an
    (N*C_out, 1) per-row shift."""
    O, I, KH, KW = w_oihw.shape
    s = gamma / jnp.sqrt(var + eps)
    w_fold = w_oihw * s[:, None, None, None]                     # BN scale folded in
    # per-tap (co, ci) blocks, tap-major: (9, O, I)
    w_tap = jnp.transpose(w_fold, (2, 3, 0, 1)).reshape(KH * KW, O, I)
    # block-diagonal across the batch: (9, N*O, N*I)
    eye = jnp.eye(n_batch, dtype=w_oihw.dtype)
    w_bd_tap = jnp.einsum('tab,nm->tnamb', w_tap, eye).reshape(
        KH * KW, n_batch * O, n_batch * I)
    # (N*O, 9*N*I): column index = t*(N*I) + n*I + ci, matching col_ref rows.
    w_bd = jnp.transpose(w_bd_tap, (1, 0, 2)).reshape(n_batch * O, KH * KW * n_batch * I)
    shift = (s * b + beta - s * mean)                            # (O,)
    shift_bd = jnp.tile(shift, (n_batch,)).reshape(n_batch * O, 1)
    return w_bd.astype(jnp.float32), shift_bd.astype(jnp.float32)


# ------------------------- pure-JAX reference (NCHW, PyTorch semantics) ----------
def reference_forward(x, w1_oihw, b1, bn1, w2_oihw, b2, bn2, eps=1e-5):
    def conv(z, w, b):
        y = jax.lax.conv_general_dilated(
            z, w, window_strides=(1, 1), padding=((1, 1), (1, 1)),
            dimension_numbers=('NCHW', 'OIHW', 'NCHW'),
            precision=jax.lax.Precision.HIGHEST)
        return y + b[None, :, None, None]

    def bn(z, gamma, beta, mean, var):
        return ((z - mean[None, :, None, None])
                / jnp.sqrt(var[None, :, None, None] + eps)
                * gamma[None, :, None, None] + beta[None, :, None, None])

    identity = x                                    # pad_flag=True
    out = _gelu_exact(bn(conv(x, w1_oihw, b1), *bn1))
    out = bn(conv(out, w2_oihw, b2), *bn2)
    out = _gelu_exact(out + identity)
    return out


if __name__ == "__main__":
    N, C, H, W = 2, 4, 16, 16                       # in_channels == out_channels == 4
    eps = 1e-5

    key = jax.random.PRNGKey(0)
    ks = jax.random.split(key, 13)

    x = jax.random.normal(ks[0], (N, C, H, W), jnp.float32)

    # conv weights in PyTorch OIHW layout, deterministic init
    w1_oihw = jax.random.normal(ks[1], (C, C, 3, 3), jnp.float32) * 0.1
    b1 = jax.random.normal(ks[2], (C,), jnp.float32) * 0.1
    w2_oihw = jax.random.normal(ks[3], (C, C, 3, 3), jnp.float32) * 0.1
    b2 = jax.random.normal(ks[4], (C,), jnp.float32) * 0.1

    # BatchNorm (eval-mode) parameters / running stats
    gamma1 = 1.0 + 0.1 * jax.random.normal(ks[5], (C,), jnp.float32)
    beta1 = 0.1 * jax.random.normal(ks[6], (C,), jnp.float32)
    mean1 = 0.1 * jax.random.normal(ks[7], (C,), jnp.float32)
    var1 = 0.5 + 0.5 * jnp.abs(jax.random.normal(ks[8], (C,), jnp.float32))
    gamma2 = 1.0 + 0.1 * jax.random.normal(ks[9], (C,), jnp.float32)
    beta2 = 0.1 * jax.random.normal(ks[10], (C,), jnp.float32)
    mean2 = 0.1 * jax.random.normal(ks[11], (C,), jnp.float32)
    var2 = 0.5 + 0.5 * jnp.abs(jax.random.normal(ks[12], (C,), jnp.float32))

    # ---- fold conv bias + eval BN into block-diagonal batched weights (trace-time) ----
    w1f, t1 = pack_conv_bn(w1_oihw, b1, gamma1, beta1, mean1, var1, N, eps)
    w2f, t2 = pack_conv_bn(w2_oihw, b2, gamma2, beta2, mean2, var2, N, eps)
    kernel_params = (w1f, t1, w2f, t2)

    out = residual_block_forward(x, kernel_params)
    out = jax.block_until_ready(out)

    ref = reference_forward(x, w1_oihw, b1, (gamma1, beta1, mean1, var1),
                            w2_oihw, b2, (gamma2, beta2, mean2, var2), eps=eps)
    ref = jax.block_until_ready(ref)

    assert out.shape == (N, C, H, W)
    # Kernel matmuls run at Precision.HIGHEST (free on an ~idle MXU), so the result
    # tracks the fp32 reference closely.
    assert jnp.allclose(out, ref, atol=1e-3, rtol=1e-3), (
        f"max abs diff = {jnp.max(jnp.abs(out - ref))}")

    print("KERNEL_OK")
</pallas_src>

<mosaic_0001>
module attributes {stable_mosaic.version = 11 : i64} {
  func.func @residual_block_kernel(%arg0: i32, %arg1: memref<8x256xf32, #tpu.memory_space<vmem>>, %arg2: memref<8x72xf32, #tpu.memory_space<vmem>>, %arg3: memref<8x1xf32, #tpu.memory_space<vmem>>, %arg4: memref<8x72xf32, #tpu.memory_space<vmem>>, %arg5: memref<8x1xf32, #tpu.memory_space<vmem>>, %arg6: memref<8x256xf32, #tpu.memory_space<vmem>>, %arg7: memref<8x512xf32, #tpu.memory_space<vmem>>, %arg8: memref<72x256xf32, #tpu.memory_space<vmem>>) attributes {dimension_semantics = [#tpu.dimension_semantics<arbitrary>], iteration_bounds = array<i64: 1>, scalar_prefetch = 0 : i64, scratch_operands = 2 : i64, tpu.core_type = #tpu.core_type<tc>, window_params = [{pipeline_mode = #tpu.pipeline_mode<synchronous>, transform_indices = @transform_0, window_bounds = array<i64: 8, 256>}, {pipeline_mode = #tpu.pipeline_mode<synchronous>, transform_indices = @transform_1, window_bounds = array<i64: 8, 72>}, {pipeline_mode = #tpu.pipeline_mode<synchronous>, transform_indices = @transform_2, window_bounds = array<i64: 8, 1>}, {pipeline_mode = #tpu.pipeline_mode<synchronous>, transform_indices = @transform_3, window_bounds = array<i64: 8, 72>}, {pipeline_mode = #tpu.pipeline_mode<synchronous>, transform_indices = @transform_4, window_bounds = array<i64: 8, 1>}, {pipeline_mode = #tpu.pipeline_mode<synchronous>, transform_indices = @transform_5, window_bounds = array<i64: 8, 256>}]} {
    %c0 = arith.constant 0 : index
    %c0_0 = arith.constant 0 : index
    %0 = vector.load %arg1[%c0, %c0_0] : memref<8x256xf32, #tpu.memory_space<vmem>>, vector<8x256xf32>
    %cst = arith.constant 0.000000e+00 : f32
    %1 = vector.broadcast %cst : f32 to vector<8x128xf32>
    %c0_1 = arith.constant 0 : index
    %c0_2 = arith.constant 0 : index
    %2 = vector.load %arg7[%c0_1, %c0_2] : memref<8x512xf32, #tpu.memory_space<vmem>>, vector<8x128xf32>
    tpu.vector_store %arg7[%c0_1, %c0_2], %1 {strides = array<i32>} : memref<8x512xf32, #tpu.memory_space<vmem>>, vector<8x128xf32>,
    %cst_3 = arith.constant 0.000000e+00 : f32
    %3 = vector.broadcast %cst_3 : f32 to vector<8x128xf32>
    %c0_4 = arith.constant 0 : index
    %c384 = arith.constant 384 : index
    %4 = vector.load %arg7[%c0_4, %c384] : memref<8x512xf32, #tpu.memory_space<vmem>>, vector<8x128xf32>
    tpu.vector_store %arg7[%c0_4, %c384], %3 {strides = array<i32>} : memref<8x512xf32, #tpu.memory_space<vmem>>, vector<8x128xf32>,
    %5 = tpu.iota {dimensions = array<i32: 1>} : vector<8x256xi32>
    %c16_i32 = arith.constant 16 : i32
    %c0_i32 = arith.constant 0 : i32
    %6 = arith.cmpi eq, %c16_i32, %c0_i32 : i32
    %c1_i32 = arith.constant 1 : i32
    %7 = arith.select %6, %c1_i32, %c16_i32 : i32
    %8 = vector.broadcast %7 : i32 to vector<8x256xi32>
    %9 = arith.remsi %5, %8 : vector<8x256xi32>
    %c0_i32_5 = arith.constant 0 : i32
    %10 = vector.broadcast %c0_i32_5 : i32 to vector<8x256xi32>
    %11 = arith.cmpi ne, %9, %10 : vector<8x256xi32>
    %c0_i32_6 = arith.constant 0 : i32
    %12 = vector.broadcast %c0_i32_6 : i32 to vector<8x256xi32>
    %13 = arith.cmpi slt, %9, %12 : vector<8x256xi32>
    %c0_i32_7 = arith.constant 0 : i32
    %14 = arith.cmpi slt, %7, %c0_i32_7 : i32
    %15 = vector.broadcast %14 : i1 to vector<8x256xi1>
    %16 = vector.broadcast %15 : vector<8x256xi1> to vector<8x256xi1>
    %17 = arith.xori %13, %16 : vector<8x256xi1>
    %18 = arith.andi %17, %11 : vector<8x256xi1>
    %19 = vector.broadcast %7 : i32 to vector<8x256xi32>
    %20 = arith.addi %9, %19 : vector<8x256xi32>
    %21 = arith.select %18, %20, %9 : vector<8x256xi1>, vector<8x256xi32>
    %c0_i32_8 = arith.constant 0 : i32
    %22 = vector.broadcast %c0_i32_8 : i32 to vector<8x256xi32>
    %23 = arith.cmpi ne, %21, %22 : vector<8x256xi32>
    %c15_i32 = arith.constant 15 : i32
    %24 = vector.broadcast %c15_i32 : i32 to vector<8x256xi32>
    %25 = arith.cmpi ne, %21, %24 : vector<8x256xi32>
    %c0_9 = arith.constant 0 : index
    %c0_10 = arith.constant 0 : index
    %26 = vector.load %arg2[%c0_9, %c0_10] : memref<8x72xf32, #tpu.memory_space<vmem>>, vector<8x72xf32>
    %c0_11 = arith.constant 0 : index
    %c128 = arith.constant 128 : index
    %27 = vector.load %arg7[%c0_11, %c128] : memref<8x512xf32, #tpu.memory_space<vmem>>, vector<8x256xf32>
    tpu.vector_store %arg7[%c0_11, %c128], %0 {strides = array<i32>} : memref<8x512xf32, #tpu.memory_space<vmem>>, vector<8x256xf32>,
    %c0_12 = arith.constant 0 : index
    %c111 = arith.constant 111 : index
    %28 = vector.load %arg7[%c0_12, %c111] : memref<8x512xf32, #tpu.memory_space<vmem>>, vector<8x256xf32>
    %cst_13 = arith.constant 0.000000e+00 : f32
    %29 = vector.broadcast %cst_13 : f32 to vector<8x256xf32>
    %30 = arith.select %23, %28, %29 : vector<8x256xi1>, vector<8x256xf32>
    %c0_14 = arith.constant 0 : index
    %c0_15 = arith.constant 0 : index
    %31 = vector.load %arg8[%c0_14, %c0_15] : memref<72x256xf32, #tpu.memory_space<vmem>>, vector<8x256xf32>
    tpu.vector_store %arg8[%c0_14, %c0_15], %30 {strides = array<i32>} : memref<72x256xf32, #tpu.memory_space<vmem>>, vector<8x256xf32>,
    %c0_16 = arith.constant 0 : index
    %c112 = arith.constant 112 : index
    %32 = vector.load %arg7[%c0_16, %c112] : memref<8x512xf32, #tpu.memory_space<vmem>>, vector<8x256xf32>
    %c8 = arith.constant 8 : index
    %c0_17 = arith.constant 0 : index
    %33 = vector.load %arg8[%c8, %c0_17] : memref<72x256xf32, #tpu.memory_space<vmem>>, vector<8x256xf32>
    tpu.vector_store %arg8[%c8, %c0_17], %32 {strides = array<i32>} : memref<72x256xf32, #tpu.memory_space<vmem>>, vector<8x256xf32>,
    %c0_18 = arith.constant 0 : index
    %c113 = arith.constant 113 : index
    %34 = vector.load %arg7[%c0_18, %c113] : memref<8x512xf32, #tpu.memory_space<vmem>>, vector<8x256xf32>
    %cst_19 = arith.constant 0.000000e+00 : f32
    %35 = vector.broadcast %cst_19 : f32 to vector<8x256xf32>
    %36 = arith.select %25, %34, %35 : vector<8x256xi1>, vector<8x256xf32>
    %c16 = arith.constant 16 : index
    %c0_20 = arith.constant 0 : index
    %37 = vector.load %arg8[%c16, %c0_20] : memref<72x256xf32, #tpu.memory_space<vmem>>, vector<8x256xf32>
    tpu.vector_store %arg8[%c16, %c0_20], %36 {strides = array<i32>} : memref<72x256xf32, #tpu.memory_space<vmem>>, vector<8x256xf32>,
    %c0_21 = arith.constant 0 : index
    %c127 = arith.constant 127 : index
    %38 = vector.load %arg7[%c0_21, %c127] : memref<8x512xf32, #tpu.memory_space<vmem>>, vector<8x256xf32>
    %cst_22 = arith.constant 0.000000e+00 : f32
    %39 = vector.broadcast %cst_22 : f32 to vector<8x256xf32>
    %40 = arith.select %23, %38, %39 : vector<8x256xi1>, vector<8x256xf32>
    %c24 = arith.constant 24 : index
    %c0_23 = arith.constant 0 : index
    %41 = vector.load %arg8[%c24, %c0_23] : memref<72x256xf32, #tpu.memory_space<vmem>>, vector<8x256xf32>
    tpu.vector_store %arg8[%c24, %c0_23], %40 {strides = array<i32>} : memref<72x256xf32, #tpu.memory_space<vmem>>, vector<8x256xf32>,
    %c0_24 = arith.constant 0 : index
    %c128_25 = arith.constant 128 : index
    %42 = vector.load %arg7[%c0_24, %c128_25] : memref<8x512xf32, #tpu.memory_space<vmem>>, vector<8x256xf32>
    %c32 = arith.constant 32 : index
    %c0_26 = arith.constant 0 : index
    %43 = vector.load %arg8[%c32, %c0_26] : memref<72x256xf32, #tpu.memory_space<vmem>>, vector<8x256xf32>
    tpu.vector_store %arg8[%c32, %c0_26], %42 {strides = array<i32>} : memref<72x256xf32, #tpu.memory_space<vmem>>, vector<8x256xf32>,
    %c0_27 = arith.constant 0 : index
    %c129 = arith.constant 129 : index
    %44 = vector.load %arg7[%c0_27, %c129] : memref<8x512xf32, #tpu.memory_space<vmem>>, vector<8x256xf32>
    %cst_28 = arith.constant 0.000000e+00 : f32
    %45 = vector.broadcast %cst_28 : f32 to vector<8x256xf32>
    %46 = arith.select %25, %44, %45 : vector<8x256xi1>, vector<8x256xf32>
    %c40 = arith.constant 40 : index
    %c0_29 = arith.constant 0 : index
    %47 = vector.load %arg8[%c40, %c0_29] : memref<72x256xf32, #tpu.memory_space<vmem>>, vector<8x256xf32>
    tpu.vector_store %arg8[%c40, %c0_29], %46 {strides = array<i32>} : memref<72x256xf32, #tpu.memory_space<vmem>>, vector<8x256xf32>,
    %c0_30 = arith.constant 0 : index
    %c143 = arith.constant 143 : index
    %48 = vector.load %arg7[%c0_30, %c143] : memref<8x512xf32, #tpu.memory_space<vmem>>, vector<8x256xf32>
    %cst_31 = arith.constant 0.000000e+00 : f32
    %49 = vector.broadcast %cst_31 : f32 to vector<8x256xf32>
    %50 = arith.select %23, %48, %49 : vector<8x256xi1>, vector<8x256xf32>
    %c48 = arith.constant 48 : index
    %c0_32 = arith.constant 0 : index
    %51 = vector.load %arg8[%c48, %c0_32] : memref<72x256xf32, #tpu.memory_space<vmem>>, vector<8x256xf32>
    tpu.vector_store %arg8[%c48, %c0_32], %50 {strides = array<i32>} : memref<72x256xf32, #tpu.memory_space<vmem>>, vector<8x256xf32>,
    %c0_33 = arith.constant 0 : index
    %c144 = arith.constant 144 : index
    %52 = vector.load %arg7[%c0_33, %c144] : memref<8x512xf32, #tpu.memory_space<vmem>>, vector<8x256xf32>
    %c56 = arith.constant 56 : index
    %c0_34 = arith.constant 0 : index
    %53 = vector.load %arg8[%c56, %c0_34] : memref<72x256xf32, #tpu.memory_space<vmem>>, vector<8x256xf32>
    tpu.vector_store %arg8[%c56, %c0_34], %52 {strides = array<i32>} : memref<72x256xf32, #tpu.memory_space<vmem>>, vector<8x256xf32>,
    %c0_35 = arith.constant 0 : index
    %c145 = arith.constant 145 : index
    %54 = vector.load %arg7[%c0_35, %c145] : memref<8x512xf32, #tpu.memory_space<vmem>>, vector<8x256xf32>
    %cst_36 = arith.constant 0.000000e+00 : f32
    %55 = vector.broadcast %cst_36 : f32 to vector<8x256xf32>
    %56 = arith.select %25, %54, %55 : vector<8x256xi1>, vector<8x256xf32>
    %c64 = arith.constant 64 : index
    %c0_37 = arith.constant 0 : index
    %57 = vector.load %arg8[%c64, %c0_37] : memref<72x256xf32, #tpu.memory_space<vmem>>, vector<8x256xf32>
    tpu.vector_store %arg8[%c64, %c0_37], %56 {strides = array<i32>} : memref<72x256xf32, #tpu.memory_space<vmem>>, vector<8x256xf32>,
    %c0_38 = arith.constant 0 : index
    %c0_39 = arith.constant 0 : index
    %58 = vector.load %arg8[%c0_38, %c0_39] : memref<72x256xf32, #tpu.memory_space<vmem>>, vector<72x256xf32>
    %cst_40 = arith.constant dense<0.000000e+00> : vector<8x256xf32>
    %59 = tpu.matmul %26, %58, %cst_40 {dimension_numbers = #tpu.dot_dimension_numbers<[1], [0], [0], [1], [0, 0, 1, 1], [], []>, precision = #tpu.contract_precision<fp32>} : vector<8x72xf32>, vector<72x256xf32>, vector<8x256xf32> -> vector<8x256xf32>
    %c0_41 = arith.constant 0 : index
    %c0_42 = arith.constant 0 : index
    %60 = vector.load %arg3[%c0_41, %c0_42] : memref<8x1xf32, #tpu.memory_space<vmem>>, vector<8x1xf32>
    %61 = vector.broadcast %60 : vector<8x1xf32> to vector<8x256xf32>
    %62 = arith.addf %59, %61 : vector<8x256xf32>
    %cst_43 = arith.constant 5.000000e-01 : f32
    %63 = vector.broadcast %cst_43 : f32 to vector<8x256xf32>
    %64 = arith.mulf %63, %62 : vector<8x256xf32>
    %cst_44 = arith.constant 0.707106769 : f32
    %65 = vector.broadcast %cst_44 : f32 to vector<8x256xf32>
    %66 = arith.mulf %62, %65 : vector<8x256xf32>
    %67 = math.erf %66 : vector<8x256xf32>
    %cst_45 = arith.constant 1.000000e+00 : f32
    %68 = vector.broadcast %cst_45 : f32 to vector<8x256xf32>
    %69 = arith.addf %68, %67 : vector<8x256xf32>
    %70 = arith.mulf %64, %69 : vector<8x256xf32>
    %c0_46 = arith.constant 0 : index
    %c0_47 = arith.constant 0 : index
    %71 = vector.load %arg4[%c0_46, %c0_47] : memref<8x72xf32, #tpu.memory_space<vmem>>, vector<8x72xf32>
    %c0_48 = arith.constant 0 : index
    %c128_49 = arith.constant 128 : index
    %72 = vector.load %arg7[%c0_48, %c128_49] : memref<8x512xf32, #tpu.memory_space<vmem>>, vector<8x256xf32>
    tpu.vector_store %arg7[%c0_48, %c128_49], %70 {strides = array<i32>} : memref<8x512xf32, #tpu.memory_space<vmem>>, vector<8x256xf32>,
    %c0_50 = arith.constant 0 : index
    %c111_51 = arith.constant 111 : index
    %73 = vector.load %arg7[%c0_50, %c111_51] : memref<8x512xf32, #tpu.memory_space<vmem>>, vector<8x256xf32>
    %cst_52 = arith.constant 0.000000e+00 : f32
    %74 = vector.broadcast %cst_52 : f32 to vector<8x256xf32>
    %75 = arith.select %23, %73, %74 : vector<8x256xi1>, vector<8x256xf32>
    %c0_53 = arith.constant 0 : index
    %c0_54 = arith.constant 0 : index
    %76 = vector.load %arg8[%c0_53, %c0_54] : memref<72x256xf32, #tpu.memory_space<vmem>>, vector<8x256xf32>
    tpu.vector_store %arg8[%c0_53, %c0_54], %75 {strides = array<i32>} : memref<72x256xf32, #tpu.memory_space<vmem>>, vector<8x256xf32>,
    %c0_55 = arith.constant 0 : index
    %c112_56 = arith.constant 112 : index
    %77 = vector.load %arg7[%c0_55, %c112_56] : memref<8x512xf32, #tpu.memory_space<vmem>>, vector<8x256xf32>
    %c8_57 = arith.constant 8 : index
    %c0_58 = arith.constant 0 : index
    %78 = vector.load %arg8[%c8_57, %c0_58] : memref<72x256xf32, #tpu.memory_space<vmem>>, vector<8x256xf32>
    tpu.vector_store %arg8[%c8_57, %c0_58], %77 {strides = array<i32>} : memref<72x256xf32, #tpu.memory_space<vmem>>, vector<8x256xf32>,
    %c0_59 = arith.constant 0 : index
    %c113_60 = arith.constant 113 : index
    %79 = vector.load %arg7[%c0_59, %c113_60] : memref<8x512xf32, #tpu.memory_space<vmem>>, vector<8x256xf32>
    %cst_61 = arith.constant 0.000000e+00 : f32
    %80 = vector.broadcast %cst_61 : f32 to vector<8x256xf32>
    %81 = arith.select %25, %79, %80 : vector<8x256xi1>, vector<8x256xf32>
    %c16_62 = arith.constant 16 : index
    %c0_63 = arith.constant 0 : index
    %82 = vector.load %arg8[%c16_62, %c0_63] : memref<72x256xf32, #tpu.memory_space<vmem>>, vector<8x256xf32>
    tpu.vector_store %arg8[%c16_62, %c0_63], %81 {strides = array<i32>} : memref<72x256xf32, #tpu.memory_space<vmem>>, vector<8x256xf32>,
    %c0_64 = arith.constant 0 : index
    %c127_65 = arith.constant 127 : index
    %83 = vector.load %arg7[%c0_64, %c127_65] : memref<8x512xf32, #tpu.memory_space<vmem>>, vector<8x256xf32>
    %cst_66 = arith.constant 0.000000e+00 : f32
    %84 = vector.broadcast %cst_66 : f32 to vector<8x256xf32>
    %85 = arith.select %23, %83, %84 : vector<8x256xi1>, vector<8x256xf32>
    %c24_67 = arith.constant 24 : index
    %c0_68 = arith.constant 0 : index
    %86 = vector.load %arg8[%c24_67, %c0_68] : memref<72x256xf32, #tpu.memory_space<vmem>>, vector<8x256xf32>
    tpu.vector_store %arg8[%c24_67, %c0_68], %85 {strides = array<i32>} : memref<72x256xf32, #tpu.memory_space<vmem>>, vector<8x256xf32>,
    %c0_69 = arith.constant 0 : index
    %c128_70 = arith.constant 128 : index
    %87 = vector.load %arg7[%c0_69, %c128_70] : memref<8x512xf32, #tpu.memory_space<vmem>>, vector<8x256xf32>
    %c32_71 = arith.constant 32 : index
    %c0_72 = arith.constant 0 : index
    %88 = vector.load %arg8[%c32_71, %c0_72] : memref<72x256xf32, #tpu.memory_space<vmem>>, vector<8x256xf32>
    tpu.vector_store %arg8[%c32_71, %c0_72], %87 {strides = array<i32>} : memref<72x256xf32, #tpu.memory_space<vmem>>, vector<8x256xf32>,
    %c0_73 = arith.constant 0 : index
    %c129_74 = arith.constant 129 : index
    %89 = vector.load %arg7[%c0_73, %c129_74] : memref<8x512xf32, #tpu.memory_space<vmem>>, vector<8x256xf32>
    %cst_75 = arith.constant 0.000000e+00 : f32
    %90 = vector.broadcast %cst_75 : f32 to vector<8x256xf32>
    %91 = arith.select %25, %89, %90 : vector<8x256xi1>, vector<8x256xf32>
    %c40_76 = arith.constant 40 : index
    %c0_77 = arith.constant 0 : index
    %92 = vector.load %arg8[%c40_76, %c0_77] : memref<72x256xf32, #tpu.memory_space<vmem>>, vector<8x256xf32>
    tpu.vector_store %arg8[%c40_76, %c0_77], %91 {strides = array<i32>} : memref<72x256xf32, #tpu.memory_space<vmem>>, vector<8x256xf32>,
    %c0_78 = arith.constant 0 : index
    %c143_79 = arith.constant 143 : index
    %93 = vector.load %arg7[%c0_78, %c143_79] : memref<8x512xf32, #tpu.memory_space<vmem>>, vector<8x256xf32>
    %cst_80 = arith.constant 0.000000e+00 : f32
    %94 = vector.broadcast %cst_80 : f32 to vector<8x256xf32>
    %95 = arith.select %23, %93, %94 : vector<8x256xi1>, vector<8x256xf32>
    %c48_81 = arith.constant 48 : index
    %c0_82 = arith.constant 0 : index
    %96 = vector.load %arg8[%c48_81, %c0_82] : memref<72x256xf32, #tpu.memory_space<vmem>>, vector<8x256xf32>
    tpu.vector_store %arg8[%c48_81, %c0_82], %95 {strides = array<i32>} : memref<72x256xf32, #tpu.memory_space<vmem>>, vector<8x256xf32>,
    %c0_83 = arith.constant 0 : index
    %c144_84 = arith.constant 144 : index
    %97 = vector.load %arg7[%c0_83, %c144_84] : memref<8x512xf32, #tpu.memory_space<vmem>>, vector<8x256xf32>
    %c56_85 = arith.constant 56 : index
    %c0_86 = arith.constant 0 : index
    %98 = vector.load %arg8[%c56_85, %c0_86] : memref<72x256xf32, #tpu.memory_space<vmem>>, vector<8x256xf32>
    tpu.vector_store %arg8[%c56_85, %c0_86], %97 {strides = array<i32>} : memref<72x256xf32, #tpu.memory_space<vmem>>, vector<8x256xf32>,
    %c0_87 = arith.constant 0 : index
    %c145_88 = arith.constant 145 : index
    %99 = vector.load %arg7[%c0_87, %c145_88] : memref<8x512xf32, #tpu.memory_space<vmem>>, vector<8x256xf32>
    %cst_89 = arith.constant 0.000000e+00 : f32
    %100 = vector.broadcast %cst_89 : f32 to vector<8x256xf32>
    %101 = arith.select %25, %99, %100 : vector<8x256xi1>, vector<8x256xf32>
    %c64_90 = arith.constant 64 : index
    %c0_91 = arith.constant 0 : index
    %102 = vector.load %arg8[%c64_90, %c0_91] : memref<72x256xf32, #tpu.memory_space<vmem>>, vector<8x256xf32>
    tpu.vector_store %arg8[%c64_90, %c0_91], %101 {strides = array<i32>} : memref<72x256xf32, #tpu.memory_space<vmem>>, vector<8x256xf32>,
    %c0_92 = arith.constant 0 : index
    %c0_93 = arith.constant 0 : index
    %103 = vector.load %arg8[%c0_92, %c0_93] : memref<72x256xf32, #tpu.memory_space<vmem>>, vector<72x256xf32>
    %cst_94 = arith.constant dense<0.000000e+00> : vector<8x256xf32>
    %104 = tpu.matmul %71, %103, %cst_94 {dimension_numbers = #tpu.dot_dimension_numbers<[1], [0], [0], [1], [0, 0, 1, 1], [], []>, precision = #tpu.contract_precision<fp32>} : vector<8x72xf32>, vector<72x256xf32>, vector<8x256xf32> -> vector<8x256xf32>
    %c0_95 = arith.constant 0 : index
    %c0_96 = arith.constant 0 : index
    %105 = vector.load %arg5[%c0_95, %c0_96] : memref<8x1xf32, #tpu.memory_space<vmem>>, vector<8x1xf32>
    %106 = vector.broadcast %105 : vector<8x1xf32> to vector<8x256xf32>
    %107 = arith.addf %104, %106 : vector<8x256xf32>
    %108 = arith.addf %107, %0 : vector<8x256xf32>
    %cst_97 = arith.constant 5.000000e-01 : f32
    %109 = vector.broadcast %cst_97 : f32 to vector<8x256xf32>
    %110 = arith.mulf %109, %108 : vector<8x256xf32>
    %cst_98 = arith.constant 0.707106769 : f32
    %111 = vector.broadcast %cst_98 : f32 to vector<8x256xf32>
    %112 = arith.mulf %108, %111 : vector<8x256xf32>
    %113 = math.erf %112 : vector<8x256xf32>
    %cst_99 = arith.constant 1.000000e+00 : f32
    %114 = vector.broadcast %cst_99 : f32 to vector<8x256xf32>
    %115 = arith.addf %114, %113 : vector<8x256xf32>
    %116 = arith.mulf %110, %115 : vector<8x256xf32>
    %c0_100 = arith.constant 0 : index
    %c0_101 = arith.constant 0 : index
    %117 = vector.load %arg6[%c0_100, %c0_101] : memref<8x256xf32, #tpu.memory_space<vmem>>, vector<8x256xf32>
    tpu.vector_store %arg6[%c0_100, %c0_101], %116 {strides = array<i32>} : memref<8x256xf32, #tpu.memory_space<vmem>>, vector<8x256xf32>,
    return
  }
  func.func @transform_0(%arg0: i32) -> (i32, i32) {
    %c0_i32 = arith.constant 0 : i32
    %c0_i32_0 = arith.constant 0 : i32
    %c0_i32_1 = arith.constant 0 : i32
    return %c0_i32, %c0_i32_0 : i32, i32
  }
  func.func @transform_1(%arg0: i32) -> (i32, i32) {
    %c0_i32 = arith.constant 0 : i32
    %c0_i32_0 = arith.constant 0 : i32
    %c0_i32_1 = arith.constant 0 : i32
    return %c0_i32, %c0_i32_0 : i32, i32
  }
  func.func @transform_2(%arg0: i32) -> (i32, i32) {
    %c0_i32 = arith.constant 0 : i32
    %c0_i32_0 = arith.constant 0 : i32
    %c0_i32_1 = arith.constant 0 : i32
    return %c0_i32, %c0_i32_0 : i32, i32
  }
  func.func @transform_3(%arg0: i32) -> (i32, i32) {
    %c0_i32 = arith.constant 0 : i32
    %c0_i32_0 = arith.constant 0 : i32
    %c0_i32_1 = arith.constant 0 : i32
    return %c0_i32, %c0_i32_0 : i32, i32
  }
  func.func @transform_4(%arg0: i32) -> (i32, i32) {
    %c0_i32 = arith.constant 0 : i32
    %c0_i32_0 = arith.constant 0 : i32
    %c0_i32_1 = arith.constant 0 : i32
    return %c0_i32, %c0_i32_0 : i32, i32
  }
  func.func @transform_5(%arg0: i32) -> (i32, i32) {
    %c0_i32 = arith.constant 0 : i32
    %c0_i32_0 = arith.constant 0 : i32
    %c0_i32_1 = arith.constant 0 : i32
    return %c0_i32, %c0_i32_0 : i32, i32
  }
}

</mosaic_0001>

<llo_original>
// kernel: tpu_custom_call.1
$region0: #{tpu_custom_call.1}
  #allocation0 [shape = 'u32[]', space=smem, size = 0x4, offset = 0x4, fixed_abs, tag = 'smem constant byte address 0x4 - core index']
  #allocation1 [shape = 'u32[144,128]{1,0:T(1,128)}', space=vmem, size = 0x12000, scoped, tag = 'internal scratch']
  #allocation2 [shape = 'f32[8,512]{1,0:T(8,128)}', space=vmem, size = 0x4000, scoped, tag = 'scratch operand']
  #allocation3 [shape = 'f32[72,256]{1,0:T(8,128)}', space=vmem, size = 0x12000, scoped, tag = 'scratch operand']
  %s0 = inlined_call_operand.vmem [shape: f32[8,256], index: 0, kind: input, shape index: {}]
  %s1 = inlined_call_operand.hbm [shape: f32[8,72], index: 1, kind: input, shape index: {}]
  %s2 = inlined_call_operand.vmem [shape: f32[8,1], index: 2, kind: input, shape index: {}]
  %s3 = inlined_call_operand.hbm [shape: f32[8,72], index: 3, kind: input, shape index: {}]
  %s4 = inlined_call_operand.vmem [shape: f32[8,1], index: 4, kind: input, shape index: {}]
  %s5 = inlined_call_operand.hbm [shape: f32[8,256], index: 5, kind: output, shape index: {}]
  %s6 = sld [smem:[#allocation0]]
  $region38: #{tpu_custom_call.1} parent=0
    _
  %s8 = ssub.s32 1, %s6
  %s9 = scalar_select 0, %s8, %s6
  $region1: #{tpu_custom_call.1} parent=0
    #allocation4 [shape = 'u8[4096]{0}', space=vmem, size = 0x1000, scoped, tag = 'input window, operand 1, single buffered']
    #allocation5 [shape = 's32[1]{0}', space=sflag, size = 0x4, scoped, tag = 'scoped memory for tpu_custom_call.1']
    #allocation6 [shape = 's32[1]{0}', space=sflag, size = 0x4, scoped, tag = 'scoped memory for tpu_custom_call.1']
    #allocation7 [shape = 'u8[4096]{0}', space=vmem, size = 0x1000, scoped, tag = 'input window, operand 3, single buffered']
    #allocation8 [shape = 's32[1]{0}', space=sflag, size = 0x4, scoped, tag = 'scoped memory for tpu_custom_call.1']
    #allocation9 [shape = 'u8[8192]{0}', space=vmem, size = 0x2000, scoped, tag = 'output window, operand 0, single buffered']
    %10 = vsyncpa [#allocation5], 0
    %11 = vsyncpa [#allocation8], 0
    %12 = vsyncpa [#allocation6], 0
    // Predicated region
    $region2: #{tpu_custom_call.1} parent=1 // pred_check
      _
    $region3: #{tpu_custom_call.1} parent=1 // pred_check_branch
      %14 = sbr.rel (0) target = $region5
    $region4: #{tpu_custom_call.1} parent=1 // pred_region
      _
    $region5: #{tpu_custom_call.1} parent=1 // pred_fallthru
      _
    // Predicated region
    $region6: #{tpu_custom_call.1} parent=1 // pred_check
      _
    $region7: #{tpu_custom_call.1} parent=1 // pred_check_branch
      %16 = sbr.rel (0) target = $region9
    $region8: #{tpu_custom_call.1} parent=1 // pred_region
      %s18 = ssub.s32 128, 128
      %19 = vsyncadd [#allocation5], %s18
      %s21 = sshll.u32 [#allocation4], 4
      %s22 = int_to_ptr.vmem [resolvable:$true] %s21
      %24 = dma.hbm_to_vmem [thread:$0]  %s1, 128, %s22, [#allocation5]
    $region9: #{tpu_custom_call.1} parent=1 // pred_fallthru
      _
    // Predicated region
    $region10: #{tpu_custom_call.1} parent=1 // pred_check
      _
    $region11: #{tpu_custom_call.1} parent=1 // pred_check_branch
      %26 = sbr.rel (0) target = $region13
    $region12: #{tpu_custom_call.1} parent=1 // pred_region
      _
    $region13: #{tpu_custom_call.1} parent=1 // pred_fallthru
      _
    // Predicated region
    $region14: #{tpu_custom_call.1} parent=1 // pred_check
      _
    $region15: #{tpu_custom_call.1} parent=1 // pred_check_branch
      %28 = sbr.rel (0) target = $region17
    $region16: #{tpu_custom_call.1} parent=1 // pred_region
      %s30 = ssub.s32 128, 128
      %31 = vsyncadd [#allocation8], %s30
      %s33 = sshll.u32 [#allocation7], 4
      %s34 = int_to_ptr.vmem [resolvable:$true] %s33
      %36 = dma.hbm_to_vmem [thread:$0]  %s3, 128, %s34, [#allocation8]
    $region17: #{tpu_custom_call.1} parent=1 // pred_fallthru
      _
    // Predicated region
    $region18: #{tpu_custom_call.1} parent=1 // pred_check
      _
    $region19: #{tpu_custom_call.1} parent=1 // pred_check_branch
      %38 = sbr.rel (0) target = $region21
    $region20: #{tpu_custom_call.1} parent=1 // pred_region
      _
    $region21: #{tpu_custom_call.1} parent=1 // pred_fallthru
      _
    // Predicated region
    $region22: #{tpu_custom_call.1} parent=1 // pred_check
      _
    $region23: #{tpu_custom_call.1} parent=1 // pred_check_branch
      %40 = sbr.rel (0) target = $region25
    $region24: #{tpu_custom_call.1} parent=1 // pred_region
      %41 = dma.done [#allocation5], 128
    $region25: #{tpu_custom_call.1} parent=1 // pred_fallthru
      _
    // Predicated region
    $region26: #{tpu_custom_call.1} parent=1 // pred_check
      _
    $region27: #{tpu_custom_call.1} parent=1 // pred_check_branch
      %43 = sbr.rel (0) target = $region29
    $region28: #{tpu_custom_call.1} parent=1 // pred_region
      %44 = dma.done [#allocation8], 128
    $region29: #{tpu_custom_call.1} parent=1 // pred_fallthru
      _
    %v45 = vld [vmem:[%s0] sm:$0xff]
    %v46 = vld [vmem:[%s0 + $0x8] sm:$0xff]
    %47 = vst [vmem:[#allocation2] sm:$0xff] 0.0
    %48 = vst [vmem:[#allocation2 + $0x18] sm:$0xff] 0.0
    %v49 = vlaneseq
    %v50 = vand.u32 %v49, 127
    %v51 = vadd.s32 %v50, 128
    %vm52 = vcmp.lt.s32.totalorder %v50, 0
    %v53 = vsub.s32 0, %v50
    %v54 = vsel %vm52, %v53, %v50
    %v55 = vshrl.u32 %v54, 4
    %v56 = vand.u32 %v54, 15
    %v57 = vsub.s32 0, %v56
    %v58 = vsel %vm52, %v57, %v56
    %vm59 = vcmp.lt.s32.totalorder %v51, 0
    %v60 = vsub.s32 0, %v51
    %v61 = vsel %vm59, %v60, %v51
    %v62 = vshrl.u32 %v61, 4
    %v63 = vand.u32 %v61, 15
    %v64 = vsub.s32 0, %v63
    %v65 = vsel %vm59, %v64, %v63
    %vm66 = vcmp.ne.s32.totalorder %v58, 0
    %vm67 = vcmp.ne.s32.totalorder %v65, 0
    %vm68 = vcmp.lt.s32.totalorder %v58, 0
    %vm69 = vcmp.lt.s32.totalorder %v65, 0
    %vm70 = vmand %vm68, %vm66
    %vm71 = vmand %vm69, %vm67
    %v72 = vadd.s32 %v58, 16
    %v73 = vadd.s32 %v65, 16
    %v74 = vsel %vm70, %v72, %v58
    %v75 = vsel %vm71, %v73, %v65
    %vm76 = vcmp.ne.s32.totalorder %v74, 0
    %vm77 = vcmp.ne.s32.totalorder %v75, 0
    %vm78 = vcmp.ne.s32.totalorder %v74, 15
    %vm79 = vcmp.ne.s32.totalorder %v75, 15
    %v80 = vld [vmem:[#allocation4] sm:$0xff]
    %81 = vst [vmem:[#allocation2 + $0x8] sm:$0xff] %v45
    %82 = vst [vmem:[#allocation2 + $0x10] sm:$0xff] %v46
    %v83 = vld [vmem:[#allocation2] sm:$0xff]
    %v84 = vld [vmem:[#allocation2 + $0x8] sm:$0xff]
    %v85 = vld [vmem:[#allocation2 + $0x10] sm:$0xff]
    %89 = vrot.lane.b32.xlu0 %v83, 17
    %v90 = vpop.permute.xlu0 %89
    %91 = vrot.lane.b32.xlu0 %v84, 17
    %v92 = vpop.permute.xlu0 %91
    %93 = vrot.lane.b32.xlu0 %v85, 17
    %v94 = vpop.permute.xlu0 %93
    %vm95 = vcmask 138240
    %v96 = vsel %vm95, %v90, %v92
    %v97 = vsel %vm95, %v92, %v94
    %v100 = vsel %vm76, %v96, 0.0
    %v101 = vsel %vm77, %v97, 0.0
    %102 = vst [vmem:[#allocation3] sm:$0xff] %v100
    %103 = vst [vmem:[#allocation3 + $0x8] sm:$0xff] %v101
    %v104 = vld [vmem:[#allocation2] sm:$0xff]
    %v105 = vld [vmem:[#allocation2 + $0x8] sm:$0xff]
    %v106 = vld [vmem:[#allocation2 + $0x10] sm:$0xff]
    %110 = vrot.lane.b32.xlu0 %v104, 16
    %v111 = vpop.permute.xlu0 %110
    %112 = vrot.lane.b32.xlu0 %v105, 16
    %v113 = vpop.permute.xlu0 %112
    %114 = vrot.lane.b32.xlu0 %v106, 16
    %v115 = vpop.permute.xlu0 %114
    %vm116 = vcmask 130048
    %v117 = vsel %vm116, %v111, %v113
    %v118 = vsel %vm116, %v113, %v115
    %121 = vst [vmem:[#allocation3 + $0x10] sm:$0xff] %v117
    %122 = vst [vmem:[#allocation3 + $0x18] sm:$0xff] %v118
    %v123 = vld [vmem:[#allocation2] sm:$0xff]
    %v124 = vld [vmem:[#allocation2 + $0x8] sm:$0xff]
    %v125 = vld [vmem:[#allocation2 + $0x10] sm:$0xff]
    %129 = vrot.lane.b32.xlu0 %v123, 15
    %v130 = vpop.permute.xlu0 %129
    %131 = vrot.lane.b32.xlu0 %v124, 15
    %v132 = vpop.permute.xlu0 %131
    %133 = vrot.lane.b32.xlu0 %v125, 15
    %v134 = vpop.permute.xlu0 %133
    %vm135 = vcmask 121856
    %v136 = vsel %vm135, %v130, %v132
    %v137 = vsel %vm135, %v132, %v134
    %v140 = vsel %vm78, %v136, 0.0
    %v141 = vsel %vm79, %v137, 0.0
    %142 = vst [vmem:[#allocation3 + $0x20] sm:$0xff] %v140
    %143 = vst [vmem:[#allocation3 + $0x28] sm:$0xff] %v141
    %v144 = vld [vmem:[#allocation2] sm:$0xff]
    %v145 = vld [vmem:[#allocation2 + $0x8] sm:$0xff]
    %v146 = vld [vmem:[#allocation2 + $0x10] sm:$0xff]
    %150 = vrot.lane.b32.xlu0 %v144, 1
    %v151 = vpop.permute.xlu0 %150
    %152 = vrot.lane.b32.xlu0 %v145, 1
    %v153 = vpop.permute.xlu0 %152
    %154 = vrot.lane.b32.xlu0 %v146, 1
    %v155 = vpop.permute.xlu0 %154
    %vm156 = vcmask 7168
    %v157 = vsel %vm156, %v151, %v153
    %v158 = vsel %vm156, %v153, %v155
    %v161 = vsel %vm76, %v157, 0.0
    %v162 = vsel %vm77, %v158, 0.0
    %163 = vst [vmem:[#allocation3 + $0x30] sm:$0xff] %v161
    %164 = vst [vmem:[#allocation3 + $0x38] sm:$0xff] %v162
    %v165 = vld [vmem:[#allocation2 + $0x8] sm:$0xff]
    %v166 = vld [vmem:[#allocation2 + $0x10] sm:$0xff]
    %167 = vst [vmem:[#allocation3 + $0x40] sm:$0xff] %v165
    %168 = vst [vmem:[#allocation3 + $0x48] sm:$0xff] %v166
    %v169 = vld [vmem:[#allocation2 + $0x8] sm:$0xff]
    %v170 = vld [vmem:[#allocation2 + $0x10] sm:$0xff]
    %v171 = vld [vmem:[#allocation2 + $0x18] sm:$0xff]
    %175 = vrot.lane.b32.xlu0 %v169, 127
    %v176 = vpop.permute.xlu0 %175
    %177 = vrot.lane.b32.xlu0 %v170, 127
    %v178 = vpop.permute.xlu0 %177
    %179 = vrot.lane.b32.xlu0 %v171, 127
    %v180 = vpop.permute.xlu0 %179
    %vm181 = vcmask 1039360
    %v182 = vsel %vm181, %v176, %v178
    %v183 = vsel %vm181, %v178, %v180
    %v186 = vsel %vm78, %v182, 0.0
    %v187 = vsel %vm79, %v183, 0.0
    %188 = vst [vmem:[#allocation3 + $0x50] sm:$0xff] %v186
    %189 = vst [vmem:[#allocation3 + $0x58] sm:$0xff] %v187
    %v190 = vld [vmem:[#allocation2 + $0x8] sm:$0xff]
    %v191 = vld [vmem:[#allocation2 + $0x10] sm:$0xff]
    %v192 = vld [vmem:[#allocation2 + $0x18] sm:$0xff]
    %196 = vrot.lane.b32.xlu0 %v190, 113
    %v197 = vpop.permute.xlu0 %196
    %198 = vrot.lane.b32.xlu0 %v191, 113
    %v199 = vpop.permute.xlu0 %198
    %200 = vrot.lane.b32.xlu0 %v192, 113
    %v201 = vpop.permute.xlu0 %200
    %vm202 = vcmask 924672
    %v203 = vsel %vm202, %v197, %v199
    %v204 = vsel %vm202, %v199, %v201
    %v207 = vsel %vm76, %v203, 0.0
    %v208 = vsel %vm77, %v204, 0.0
    %209 = vst [vmem:[#allocation3 + $0x60] sm:$0xff] %v207
    %210 = vst [vmem:[#allocation3 + $0x68] sm:$0xff] %v208
    %v211 = vld [vmem:[#allocation2 + $0x8] sm:$0xff]
    %v212 = vld [vmem:[#allocation2 + $0x10] sm:$0xff]
    %v213 = vld [vmem:[#allocation2 + $0x18] sm:$0xff]
    %217 = vrot.lane.b32.xlu0 %v211, 112
    %v218 = vpop.permute.xlu0 %217
    %219 = vrot.lane.b32.xlu0 %v212, 112
    %v220 = vpop.permute.xlu0 %219
    %221 = vrot.lane.b32.xlu0 %v213, 112
    %v222 = vpop.permute.xlu0 %221
    %vm223 = vcmask 916480
    %v224 = vsel %vm223, %v218, %v220
    %v225 = vsel %vm223, %v220, %v222
    %228 = vst [vmem:[#allocation3 + $0x70] sm:$0xff] %v224
    %229 = vst [vmem:[#allocation3 + $0x78] sm:$0xff] %v225
    %v230 = vld [vmem:[#allocation2 + $0x8] sm:$0xff]
    %v231 = vld [vmem:[#allocation2 + $0x10] sm:$0xff]
    %v232 = vld [vmem:[#allocation2 + $0x18] sm:$0xff]
    %236 = vrot.lane.b32.xlu0 %v230, 111
    %v237 = vpop.permute.xlu0 %236
    %238 = vrot.lane.b32.xlu0 %v231, 111
    %v239 = vpop.permute.xlu0 %238
    %240 = vrot.lane.b32.xlu0 %v232, 111
    %v241 = vpop.permute.xlu0 %240
    %vm242 = vcmask 908288
    %v243 = vsel %vm242, %v237, %v239
    %v244 = vsel %vm242, %v239, %v241
    %v247 = vsel %vm78, %v243, 0.0
    %v248 = vsel %vm79, %v244, 0.0
    %249 = vst [vmem:[#allocation3 + $0x80] sm:$0xff] %v247
    %250 = vst [vmem:[#allocation3 + $0x88] sm:$0xff] %v248
    %v251 = vld [vmem:[#allocation3] sm:$0xff]
    %v252 = vld [vmem:[#allocation3 + $0x8] sm:$0xff]
    %v253 = vld [vmem:[#allocation3 + $0x10] sm:$0xff]
    %v254 = vld [vmem:[#allocation3 + $0x18] sm:$0xff]
    %v255 = vld [vmem:[#allocation3 + $0x20] sm:$0xff]
    %v256 = vld [vmem:[#allocation3 + $0x28] sm:$0xff]
    %v257 = vld [vmem:[#allocation3 + $0x30] sm:$0xff]
    %v258 = vld [vmem:[#allocation3 + $0x38] sm:$0xff]
    %v259 = vld [vmem:[#allocation3 + $0x40] sm:$0xff]
    %v260 = vld [vmem:[#allocation3 + $0x48] sm:$0xff]
    %v261 = vld [vmem:[#allocation3 + $0x50] sm:$0xff]
    %v262 = vld [vmem:[#allocation3 + $0x58] sm:$0xff]
    %v263 = vld [vmem:[#allocation3 + $0x60] sm:$0xff]
    %v264 = vld [vmem:[#allocation3 + $0x68] sm:$0xff]
    %v265 = vld [vmem:[#allocation3 + $0x70] sm:$0xff]
    %v266 = vld [vmem:[#allocation3 + $0x78] sm:$0xff]
    %v267 = vld [vmem:[#allocation3 + $0x80] sm:$0xff]
    %v268 = vld [vmem:[#allocation3 + $0x88] sm:$0xff]
    %v269 = vld [vmem:[%s2] sm:$0xff]
    %271 = vset.pattern.permute.xlu0 0
    %272 = vperm.xlu0 %271, %v269
    %v273 = vpop.permute.xlu0 %272
    %vm275 = vcmask 588800
    %v277 = vsel %vm275, %v80, 0
    %279 = vmatprep.subr.mxu0 0.0
    %280 = vmatpush1.msra.mxu0 0.0
    %281 = vmatprep.subr.mxu0 0.0
    %282 = vmatpush1.msra.mxu0 0.0
    %283 = vmatprep.subr.mxu0 0.0
    %284 = vmatpush1.msra.mxu0 0.0
    %285 = vmatprep.subr.mxu0 0.0
    %286 = vmatpush1.msra.mxu0 0.0
    %287 = vmatprep.subr.mxu0 0.0
    %288 = vmatpush1.msra.mxu0 0.0
    %289 = vmatprep.subr.mxu0 0.0
    %290 = vmatpush1.msra.mxu0 0.0
    %291 = vmatprep.subr.mxu0 0.0
    %292 = vmatpush1.msra.mxu0 0.0
    %v293 = vand.u32 %v268, 4294901760
    %294 = vmatprep.subr.mxu0 %v293
    %v295 = vand.u32 %v267, 4294901760
    %296 = vmatpush1.msra.mxu0 %v295
    %v297 = vand.u32 %v266, 4294901760
    %298 = vmatprep.subr.mxu0 %v297
    %v299 = vand.u32 %v265, 4294901760
    %300 = vmatpush1.msra.mxu0 %v299
    %v301 = vand.u32 %v264, 4294901760
    %302 = vmatprep.subr.mxu0 %v301
    %v303 = vand.u32 %v263, 4294901760
    %304 = vmatpush1.msra.mxu0 %v303
    %v305 = vand.u32 %v262, 4294901760
    %306 = vmatprep.subr.mxu0 %v305
    %v307 = vand.u32 %v261, 4294901760
    %308 = vmatpush1.msra.mxu0 %v307
    %v309 = vand.u32 %v260, 4294901760
    %310 = vmatprep.subr.mxu0 %v309
    %v311 = vand.u32 %v259, 4294901760
    %312 = vmatpush1.msra.mxu0 %v311
    %v313 = vand.u32 %v258, 4294901760
    %314 = vmatprep.subr.mxu0 %v313
    %v315 = vand.u32 %v257, 4294901760
    %316 = vmatpush1.msra.mxu0 %v315
    %v317 = vand.u32 %v256, 4294901760
    %318 = vmatprep.subr.mxu0 %v317
    %v319 = vand.u32 %v255, 4294901760
    %320 = vmatpush1.msra.mxu0 %v319
    %v321 = vand.u32 %v254, 4294901760
    %322 = vmatprep.subr.mxu0 %v321
    %v323 = vand.u32 %v253, 4294901760
    %324 = vmatpush1.msra.mxu0 %v323
    %v325 = vand.u32 %v252, 4294901760
    %326 = vmatprep.subr.mxu0 %v325
    %v327 = vand.u32 %v251, 4294901760
    %328 = vmatpush1.msra.mxu0 %v327
    %329 = vmatprep.subr.mxu0 0.0
    %330 = vmatpush2.msra.mxu0 0.0
    %331 = vmatprep.subr.mxu0 0.0
    %332 = vmatpush2.msra.mxu0 0.0
    %333 = vmatprep.subr.mxu0 0.0
    %334 = vmatpush2.msra.mxu0 0.0
    %335 = vmatprep.subr.mxu0 0.0
    %336 = vmatpush2.msra.mxu0 0.0
    %337 = vmatprep.subr.mxu0 0.0
    %338 = vmatpush2.msra.mxu0 0.0
    %339 = vmatprep.subr.mxu0 0.0
    %340 = vmatpush2.msra.mxu0 0.0
    %341 = vmatprep.subr.mxu0 0.0
    %342 = vmatpush2.msra.mxu0 0.0
    %343 = vmatprep.subr.mxu0 0.0
    %344 = vmatpush2.msra.mxu0 0.0
    %345 = vmatprep.subr.mxu0 0.0
    %346 = vmatpush2.msra.mxu0 0.0
    %347 = vmatprep.subr.mxu0 0.0
    %348 = vmatpush2.msra.mxu0 0.0
    %349 = vmatprep.subr.mxu0 0.0
    %350 = vmatpush2.msra.mxu0 0.0
    %351 = vmatprep.subr.mxu0 0.0
    %352 = vmatpush2.msra.mxu0 0.0
    %353 = vmatprep.subr.mxu0 0.0
    %354 = vmatpush2.msra.mxu0 0.0
    %355 = vmatprep.subr.mxu0 0.0
    %356 = vmatpush2.msra.mxu0 0.0
    %357 = vmatprep.subr.mxu0 0.0
    %358 = vmatpush2.msra.mxu0 0.0
    %359 = vmatprep.subr.mxu0 0.0
    %360 = vmatpush2.msra.mxu0 0.0
    %361 = vmatprep.mubr.f32.mxu0 0.0
    %v362 = vand.u32 %v277, 4294901760
    %v363 = vsub.f32 %v277, %v362
    %v364 = vand.u32 %v363, 4294901760
    %v365 = vsub.f32 %v363, %v364
    %v366 = vand.u32 %v365, 4294901760
    %367 = vmatmul.mubr.f32.gmra.mxu0 %v366
    %v368 = vpop.f32.mrf.mxu0
    %v369 = vadd.f32 %v273, %v368
    %v370 = vpop.f32.mrf.mxu0
    %v371 = vadd.f32 %v273, %v370
    %372 = vdwg.mxu0
    %373 = vmatprep.subr.mxu0 0.0
    %374 = vmatpush1.msra.mxu0 0.0
    %375 = vmatprep.subr.mxu0 0.0
    %376 = vmatpush1.msra.mxu0 0.0
    %377 = vmatprep.subr.mxu0 0.0
    %378 = vmatpush1.msra.mxu0 0.0
    %379 = vmatprep.subr.mxu0 0.0
    %380 = vmatpush1.msra.mxu0 0.0
    %381 = vmatprep.subr.mxu0 0.0
    %382 = vmatpush1.msra.mxu0 0.0
    %383 = vmatprep.subr.mxu0 0.0
    %384 = vmatpush1.msra.mxu0 0.0
    %385 = vmatprep.subr.mxu0 0.0
    %386 = vmatpush1.msra.mxu0 0.0
    %v387 = vand.u32 %v268, 4294901760
    %v388 = vsub.f32 %v268, %v387
    %v389 = vand.u32 %v388, 4294901760
    %v390 = vsub.f32 %v388, %v389
    %v391 = vand.u32 %v390, 4294901760
    %392 = vmatprep.subr.mxu0 %v391
    %v393 = vand.u32 %v267, 4294901760
    %v394 = vsub.f32 %v267, %v393
    %v395 = vand.u32 %v394, 4294901760
    %v396 = vsub.f32 %v394, %v395
    %v397 = vand.u32 %v396, 4294901760
    %398 = vmatpush1.msra.mxu0 %v397
    %v399 = vand.u32 %v266, 4294901760
    %v400 = vsub.f32 %v266, %v399
    %v401 = vand.u32 %v400, 4294901760
    %v402 = vsub.f32 %v400, %v401
    %v403 = vand.u32 %v402, 4294901760
    %404 = vmatprep.subr.mxu0 %v403
    %v405 = vand.u32 %v265, 4294901760
    %v406 = vsub.f32 %v265, %v405
    %v407 = vand.u32 %v406, 4294901760
    %v408 = vsub.f32 %v406, %v407
    %v409 = vand.u32 %v408, 4294901760
    %410 = vmatpush1.msra.mxu0 %v409
    %v411 = vand.u32 %v264, 4294901760
    %v412 = vsub.f32 %v264, %v411
    %v413 = vand.u32 %v412, 4294901760
    %v414 = vsub.f32 %v412, %v413
    %v415 = vand.u32 %v414, 4294901760
    %416 = vmatprep.subr.mxu0 %v415
    %v417 = vand.u32 %v263, 4294901760
    %v418 = vsub.f32 %v263, %v417
    %v419 = vand.u32 %v418, 4294901760
    %v420 = vsub.f32 %v418, %v419
    %v421 = vand.u32 %v420, 4294901760
    %422 = vmatpush1.msra.mxu0 %v421
    %v423 = vand.u32 %v262, 4294901760
    %v424 = vsub.f32 %v262, %v423
    %v425 = vand.u32 %v424, 4294901760
    %v426 = vsub.f32 %v424, %v425
    %v427 = vand.u32 %v426, 4294901760
    %428 = vmatprep.subr.mxu0 %v427
    %v429 = vand.u32 %v261, 4294901760
    %v430 = vsub.f32 %v261, %v429
    %v431 = vand.u32 %v430, 4294901760
    %v432 = vsub.f32 %v430, %v431
    %v433 = vand.u32 %v432, 4294901760
    %434 = vmatpush1.msra.mxu0 %v433
    %v435 = vand.u32 %v260, 4294901760
    %v436 = vsub.f32 %v260, %v435
    %v437 = vand.u32 %v436, 4294901760
    %v438 = vsub.f32 %v436, %v437
    %v439 = vand.u32 %v438, 4294901760
    %440 = vmatprep.subr.mxu0 %v439
    %v441 = vand.u32 %v259, 4294901760
    %v442 = vsub.f32 %v259, %v441
    %v443 = vand.u32 %v442, 4294901760
    %v444 = vsub.f32 %v442, %v443
    %v445 = vand.u32 %v444, 4294901760
    %446 = vmatpush1.msra.mxu0 %v445
    %v447 = vand.u32 %v258, 4294901760
    %v448 = vsub.f32 %v258, %v447
    %v449 = vand.u32 %v448, 4294901760
    %v450 = vsub.f32 %v448, %v449
    %v451 = vand.u32 %v450, 4294901760
    %452 = vmatprep.subr.mxu0 %v451
    %v453 = vand.u32 %v257, 4294901760
    %v454 = vsub.f32 %v257, %v453
    %v455 = vand.u32 %v454, 4294901760
    %v456 = vsub.f32 %v454, %v455
    %v457 = vand.u32 %v456, 4294901760
    %458 = vmatpush1.msra.mxu0 %v457
    %v459 = vand.u32 %v256, 4294901760
    %v460 = vsub.f32 %v256, %v459
    %v461 = vand.u32 %v460, 4294901760
    %v462 = vsub.f32 %v460, %v461
    %v463 = vand.u32 %v462, 4294901760
    %464 = vmatprep.subr.mxu0 %v463
    %v465 = vand.u32 %v255, 4294901760
    %v466 = vsub.f32 %v255, %v465
    %v467 = vand.u32 %v466, 4294901760
    %v468 = vsub.f32 %v466, %v467
    %v469 = vand.u32 %v468, 4294901760
    %470 = vmatpush1.msra.mxu0 %v469
    %v471 = vand.u32 %v254, 4294901760
    %v472 = vsub.f32 %v254, %v471
    %v473 = vand.u32 %v472, 4294901760
    %v474 = vsub.f32 %v472, %v473
    %v475 = vand.u32 %v474, 4294901760
    %476 = vmatprep.subr.mxu0 %v475
    %v477 = vand.u32 %v253, 4294901760
    %v478 = vsub.f32 %v253, %v477
    %v479 = vand.u32 %v478, 4294901760
    %v480 = vsub.f32 %v478, %v479
    %v481 = vand.u32 %v480, 4294901760
    %482 = vmatpush1.msra.mxu0 %v481
    %v483 = vand.u32 %v252, 4294901760
    %v484 = vsub.f32 %v252, %v483
    %v485 = vand.u32 %v484, 4294901760
    %v486 = vsub.f32 %v484, %v485
    %v487 = vand.u32 %v486, 4294901760
    %488 = vmatprep.subr.mxu0 %v487
    %v489 = vand.u32 %v251, 4294901760
    %v490 = vsub.f32 %v251, %v489
    %v491 = vand.u32 %v490, 4294901760
    %v492 = vsub.f32 %v490, %v491
    %v493 = vand.u32 %v492, 4294901760
    %494 = vmatpush1.msra.mxu0 %v493
    %495 = vmatprep.subr.mxu0 0.0
    %496 = vmatpush2.msra.mxu0 0.0
    %497 = vmatprep.subr.mxu0 0.0
    %498 = vmatpush2.msra.mxu0 0.0
    %499 = vmatprep.subr.mxu0 0.0
    %500 = vmatpush2.msra.mxu0 0.0
    %501 = vmatprep.subr.mxu0 0.0
    %502 = vmatpush2.msra.mxu0 0.0
    %503 = vmatprep.subr.mxu0 0.0
    %504 = vmatpush2.msra.mxu0 0.0
    %505 = vmatprep.subr.mxu0 0.0
    %506 = vmatpush2.msra.mxu0 0.0
    %507 = vmatprep.subr.mxu0 0.0
    %508 = vmatpush2.msra.mxu0 0.0
    %509 = vmatprep.subr.mxu0 0.0
    %510 = vmatpush2.msra.mxu0 0.0
    %511 = vmatprep.subr.mxu0 0.0
    %512 = vmatpush2.msra.mxu0 0.0
    %513 = vmatprep.subr.mxu0 0.0
    %514 = vmatpush2.msra.mxu0 0.0
    %515 = vmatprep.subr.mxu0 0.0
    %516 = vmatpush2.msra.mxu0 0.0
    %517 = vmatprep.subr.mxu0 0.0
    %518 = vmatpush2.msra.mxu0 0.0
    %519 = vmatprep.subr.mxu0 0.0
    %520 = vmatpush2.msra.mxu0 0.0
    %521 = vmatprep.subr.mxu0 0.0
    %522 = vmatpush2.msra.mxu0 0.0
    %523 = vmatprep.subr.mxu0 0.0
    %524 = vmatpush2.msra.mxu0 0.0
    %525 = vmatprep.subr.mxu0 0.0
    %526 = vmatpush2.msra.mxu0 0.0
    %527 = vmatprep.mubr.f32.mxu0 0.0
    %v528 = vand.u32 %v277, 4294901760
    %529 = vmatmul.mubr.f32.gmra.mxu0 %v528
    %v530 = vpop.f32.mrf.mxu0
    %v531 = vadd.f32 %v369, %v530
    %v532 = vpop.f32.mrf.mxu0
    %v533 = vadd.f32 %v371, %v532
    %534 = vdwg.mxu0
    %535 = vmatprep.subr.mxu0 0.0
    %536 = vmatpush1.msra.mxu0 0.0
    %537 = vmatprep.subr.mxu0 0.0
    %538 = vmatpush1.msra.mxu0 0.0
    %539 = vmatprep.subr.mxu0 0.0
    %540 = vmatpush1.msra.mxu0 0.0
    %541 = vmatprep.subr.mxu0 0.0
    %542 = vmatpush1.msra.mxu0 0.0
    %543 = vmatprep.subr.mxu0 0.0
    %544 = vmatpush1.msra.mxu0 0.0
    %545 = vmatprep.subr.mxu0 0.0
    %546 = vmatpush1.msra.mxu0 0.0
    %547 = vmatprep.subr.mxu0 0.0
    %548 = vmatpush1.msra.mxu0 0.0
    %v549 = vand.u32 %v268, 4294901760
    %v550 = vsub.f32 %v268, %v549
    %551 = vmatprep.subr.mxu0 %v550
    %v552 = vand.u32 %v267, 4294901760
    %v553 = vsub.f32 %v267, %v552
    %554 = vmatpush1.msra.mxu0 %v553
    %v555 = vand.u32 %v266, 4294901760
    %v556 = vsub.f32 %v266, %v555
    %557 = vmatprep.subr.mxu0 %v556
    %v558 = vand.u32 %v265, 4294901760
    %v559 = vsub.f32 %v265, %v558
    %560 = vmatpush1.msra.mxu0 %v559
    %v561 = vand.u32 %v264, 4294901760
    %v562 = vsub.f32 %v264, %v561
    %563 = vmatprep.subr.mxu0 %v562
    %v564 = vand.u32 %v263, 4294901760
    %v565 = vsub.f32 %v263, %v564
    %566 = vmatpush1.msra.mxu0 %v565
    %v567 = vand.u32 %v262, 4294901760
    %v568 = vsub.f32 %v262, %v567
    %569 = vmatprep.subr.mxu0 %v568
    %v570 = vand.u32 %v261, 4294901760
    %v571 = vsub.f32 %v261, %v570
    %572 = vmatpush1.msra.mxu0 %v571
    %v573 = vand.u32 %v260, 4294901760
    %v574 = vsub.f32 %v260, %v573
    %575 = vmatprep.subr.mxu0 %v574
    %v576 = vand.u32 %v259, 4294901760
    %v577 = vsub.f32 %v259, %v576
    %578 = vmatpush1.msra.mxu0 %v577
    %v579 = vand.u32 %v258, 4294901760
    %v580 = vsub.f32 %v258, %v579
    %581 = vmatprep.subr.mxu0 %v580
    %v582 = vand.u32 %v257, 4294901760
    %v583 = vsub.f32 %v257, %v582
    %584 = vmatpush1.msra.mxu0 %v583
    %v585 = vand.u32 %v256, 4294901760
    %v586 = vsub.f32 %v256, %v585
    %587 = vmatprep.subr.mxu0 %v586
    %v588 = vand.u32 %v255, 4294901760
    %v589 = vsub.f32 %v255, %v588
    %590 = vmatpush1.msra.mxu0 %v589
    %v591 = vand.u32 %v254, 4294901760
    %v592 = vsub.f32 %v254, %v591
    %593 = vmatprep.subr.mxu0 %v592
    %v594 = vand.u32 %v253, 4294901760
    %v595 = vsub.f32 %v253, %v594
    %596 = vmatpush1.msra.mxu0 %v595
    %v597 = vand.u32 %v252, 4294901760
    %v598 = vsub.f32 %v252, %v597
    %599 = vmatprep.subr.mxu0 %v598
    %v600 = vand.u32 %v251, 4294901760
    %v601 = vsub.f32 %v251, %v600
    %602 = vmatpush1.msra.mxu0 %v601
    %603 = vmatprep.subr.mxu0 0.0
    %604 = vmatpush2.msra.mxu0 0.0
    %605 = vmatprep.subr.mxu0 0.0
    %606 = vmatpush2.msra.mxu0 0.0
    %607 = vmatprep.subr.mxu0 0.0
    %608 = vmatpush2.msra.mxu0 0.0
    %609 = vmatprep.subr.mxu0 0.0
    %610 = vmatpush2.msra.mxu0 0.0
    %611 = vmatprep.subr.mxu0 0.0
    %612 = vmatpush2.msra.mxu0 0.0
    %613 = vmatprep.subr.mxu0 0.0
    %614 = vmatpush2.msra.mxu0 0.0
    %615 = vmatprep.subr.mxu0 0.0
    %616 = vmatpush2.msra.mxu0 0.0
    %617 = vmatprep.subr.mxu0 0.0
    %618 = vmatpush2.msra.mxu0 0.0
    %619 = vmatprep.subr.mxu0 0.0
    %620 = vmatpush2.msra.mxu0 0.0
    %621 = vmatprep.subr.mxu0 0.0
    %622 = vmatpush2.msra.mxu0 0.0
    %623 = vmatprep.subr.mxu0 0.0
    %624 = vmatpush2.msra.mxu0 0.0
    %625 = vmatprep.subr.mxu0 0.0
    %626 = vmatpush2.msra.mxu0 0.0
    %627 = vmatprep.subr.mxu0 0.0
    %628 = vmatpush2.msra.mxu0 0.0
    %629 = vmatprep.subr.mxu0 0.0
    %630 = vmatpush2.msra.mxu0 0.0
    %631 = vmatprep.subr.mxu0 0.0
    %632 = vmatpush2.msra.mxu0 0.0
    %633 = vmatprep.subr.mxu0 0.0
    %634 = vmatpush2.msra.mxu0 0.0
    %635 = vmatprep.mubr.f32.mxu0 0.0
    %v636 = vand.u32 %v277, 4294901760
    %v637 = vsub.f32 %v277, %v636
    %638 = vmatmul.mubr.f32.gmra.mxu0 %v637
    %v639 = vpop.f32.mrf.mxu0
    %v640 = vadd.f32 %v531, %v639
    %v641 = vpop.f32.mrf.mxu0
    %v642 = vadd.f32 %v533, %v641
    %643 = vdwg.mxu0
    %644 = vmatprep.subr.mxu0 0.0
    %645 = vmatpush1.msra.mxu0 0.0
    %646 = vmatprep.subr.mxu0 0.0
    %647 = vmatpush1.msra.mxu0 0.0
    %648 = vmatprep.subr.mxu0 0.0
    %649 = vmatpush1.msra.mxu0 0.0
    %650 = vmatprep.subr.mxu0 0.0
    %651 = vmatpush1.msra.mxu0 0.0
    %652 = vmatprep.subr.mxu0 0.0
    %653 = vmatpush1.msra.mxu0 0.0
    %654 = vmatprep.subr.mxu0 0.0
    %655 = vmatpush1.msra.mxu0 0.0
    %656 = vmatprep.subr.mxu0 0.0
    %657 = vmatpush1.msra.mxu0 0.0
    %v658 = vand.u32 %v268, 4294901760
    %659 = vmatprep.subr.mxu0 %v658
    %v660 = vand.u32 %v267, 4294901760
    %661 = vmatpush1.msra.mxu0 %v660
    %v662 = vand.u32 %v266, 4294901760
    %663 = vmatprep.subr.mxu0 %v662
    %v664 = vand.u32 %v265, 4294901760
    %665 = vmatpush1.msra.mxu0 %v664
    %v666 = vand.u32 %v264, 4294901760
    %667 = vmatprep.subr.mxu0 %v666
    %v668 = vand.u32 %v263, 4294901760
    %669 = vmatpush1.msra.mxu0 %v668
    %v670 = vand.u32 %v262, 4294901760
    %671 = vmatprep.subr.mxu0 %v670
    %v672 = vand.u32 %v261, 4294901760
    %673 = vmatpush1.msra.mxu0 %v672
    %v674 = vand.u32 %v260, 4294901760
    %675 = vmatprep.subr.mxu0 %v674
    %v676 = vand.u32 %v259, 4294901760
    %677 = vmatpush1.msra.mxu0 %v676
    %v678 = vand.u32 %v258, 4294901760
    %679 = vmatprep.subr.mxu0 %v678
    %v680 = vand.u32 %v257, 4294901760
    %681 = vmatpush1.msra.mxu0 %v680
    %v682 = vand.u32 %v256, 4294901760
    %683 = vmatprep.subr.mxu0 %v682
    %v684 = vand.u32 %v255, 4294901760
    %685 = vmatpush1.msra.mxu0 %v684
    %v686 = vand.u32 %v254, 4294901760
    %687 = vmatprep.subr.mxu0 %v686
    %v688 = vand.u32 %v253, 4294901760
    %689 = vmatpush1.msra.mxu0 %v688
    %v690 = vand.u32 %v252, 4294901760
    %691 = vmatprep.subr.mxu0 %v690
    %v692 = vand.u32 %v251, 4294901760
    %693 = vmatpush1.msra.mxu0 %v692
    %694 = vmatprep.subr.mxu0 0.0
    %695 = vmatpush2.msra.mxu0 0.0
    %696 = vmatprep.subr.mxu0 0.0
    %697 = vmatpush2.msra.mxu0 0.0
    %698 = vmatprep.subr.mxu0 0.0
    %699 = vmatpush2.msra.mxu0 0.0
    %700 = vmatprep.subr.mxu0 0.0
    %701 = vmatpush2.msra.mxu0 0.0
    %702 = vmatprep.subr.mxu0 0.0
    %703 = vmatpush2.msra.mxu0 0.0
    %704 = vmatprep.subr.mxu0 0.0
    %705 = vmatpush2.msra.mxu0 0.0
    %706 = vmatprep.subr.mxu0 0.0
    %707 = vmatpush2.msra.mxu0 0.0
    %708 = vmatprep.subr.mxu0 0.0
    %709 = vmatpush2.msra.mxu0 0.0
    %710 = vmatprep.subr.mxu0 0.0
    %711 = vmatpush2.msra.mxu0 0.0
    %712 = vmatprep.subr.mxu0 0.0
    %713 = vmatpush2.msra.mxu0 0.0
    %714 = vmatprep.subr.mxu0 0.0
    %715 = vmatpush2.msra.mxu0 0.0
    %716 = vmatprep.subr.mxu0 0.0
    %717 = vmatpush2.msra.mxu0 0.0
    %718 = vmatprep.subr.mxu0 0.0
    %719 = vmatpush2.msra.mxu0 0.0
    %720 = vmatprep.subr.mxu0 0.0
    %721 = vmatpush2.msra.mxu0 0.0
    %722 = vmatprep.subr.mxu0 0.0
    %723 = vmatpush2.msra.mxu0 0.0
    %724 = vmatprep.subr.mxu0 0.0
    %725 = vmatpush2.msra.mxu0 0.0
    %726 = vmatprep.mubr.f32.mxu0 0.0
    %v727 = vand.u32 %v277, 4294901760
    %v728 = vsub.f32 %v277, %v727
    %v729 = vand.u32 %v728, 4294901760
    %730 = vmatmul.mubr.f32.gmra.mxu0 %v729
    %v731 = vpop.f32.mrf.mxu0
    %v732 = vadd.f32 %v640, %v731
    %v733 = vpop.f32.mrf.mxu0
    %v734 = vadd.f32 %v642, %v733
    %735 = vdwg.mxu0
    %736 = vmatprep.subr.mxu0 0.0
    %737 = vmatpush1.msra.mxu0 0.0
    %738 = vmatprep.subr.mxu0 0.0
    %739 = vmatpush1.msra.mxu0 0.0
    %740 = vmatprep.subr.mxu0 0.0
    %741 = vmatpush1.msra.mxu0 0.0
    %742 = vmatprep.subr.mxu0 0.0
    %743 = vmatpush1.msra.mxu0 0.0
    %744 = vmatprep.subr.mxu0 0.0
    %745 = vmatpush1.msra.mxu0 0.0
    %746 = vmatprep.subr.mxu0 0.0
    %747 = vmatpush1.msra.mxu0 0.0
    %748 = vmatprep.subr.mxu0 0.0
    %749 = vmatpush1.msra.mxu0 0.0
    %v750 = vand.u32 %v268, 4294901760
    %v751 = vsub.f32 %v268, %v750
    %v752 = vand.u32 %v751, 4294901760
    %753 = vmatprep.subr.mxu0 %v752
    %v754 = vand.u32 %v267, 4294901760
    %v755 = vsub.f32 %v267, %v754
    %v756 = vand.u32 %v755, 4294901760
    %757 = vmatpush1.msra.mxu0 %v756
    %v758 = vand.u32 %v266, 4294901760
    %v759 = vsub.f32 %v266, %v758
    %v760 = vand.u32 %v759, 4294901760
    %761 = vmatprep.subr.mxu0 %v760
    %v762 = vand.u32 %v265, 4294901760
    %v763 = vsub.f32 %v265, %v762
    %v764 = vand.u32 %v763, 4294901760
    %765 = vmatpush1.msra.mxu0 %v764
    %v766 = vand.u32 %v264, 4294901760
    %v767 = vsub.f32 %v264, %v766
    %v768 = vand.u32 %v767, 4294901760
    %769 = vmatprep.subr.mxu0 %v768
    %v770 = vand.u32 %v263, 4294901760
    %v771 = vsub.f32 %v263, %v770
    %v772 = vand.u32 %v771, 4294901760
    %773 = vmatpush1.msra.mxu0 %v772
    %v774 = vand.u32 %v262, 4294901760
    %v775 = vsub.f32 %v262, %v774
    %v776 = vand.u32 %v775, 4294901760
    %777 = vmatprep.subr.mxu0 %v776
    %v778 = vand.u32 %v261, 4294901760
    %v779 = vsub.f32 %v261, %v778
    %v780 = vand.u32 %v779, 4294901760
    %781 = vmatpush1.msra.mxu0 %v780
    %v782 = vand.u32 %v260, 4294901760
    %v783 = vsub.f32 %v260, %v782
    %v784 = vand.u32 %v783, 4294901760
    %785 = vmatprep.subr.mxu0 %v784
    %v786 = vand.u32 %v259, 4294901760
    %v787 = vsub.f32 %v259, %v786
    %v788 = vand.u32 %v787, 4294901760
    %789 = vmatpush1.msra.mxu0 %v788
    %v790 = vand.u32 %v258, 4294901760
    %v791 = vsub.f32 %v258, %v790
    %v792 = vand.u32 %v791, 4294901760
    %793 = vmatprep.subr.mxu0 %v792
    %v794 = vand.u32 %v257, 4294901760
    %v795 = vsub.f32 %v257, %v794
    %v796 = vand.u32 %v795, 4294901760
    %797 = vmatpush1.msra.mxu0 %v796
    %v798 = vand.u32 %v256, 4294901760
    %v799 = vsub.f32 %v256, %v798
    %v800 = vand.u32 %v799, 4294901760
    %801 = vmatprep.subr.mxu0 %v800
    %v802 = vand.u32 %v255, 4294901760
    %v803 = vsub.f32 %v255, %v802
    %v804 = vand.u32 %v803, 4294901760
    %805 = vmatpush1.msra.mxu0 %v804
    %v806 = vand.u32 %v254, 4294901760
    %v807 = vsub.f32 %v254, %v806
    %v808 = vand.u32 %v807, 4294901760
    %809 = vmatprep.subr.mxu0 %v808
    %v810 = vand.u32 %v253, 4294901760
    %v811 = vsub.f32 %v253, %v810
    %v812 = vand.u32 %v811, 4294901760
    %813 = vmatpush1.msra.mxu0 %v812
    %v814 = vand.u32 %v252, 4294901760
    %v815 = vsub.f32 %v252, %v814
    %v816 = vand.u32 %v815, 4294901760
    %817 = vmatprep.subr.mxu0 %v816
    %v818 = vand.u32 %v251, 4294901760
    %v819 = vsub.f32 %v251, %v818
    %v820 = vand.u32 %v819, 4294901760
    %821 = vmatpush1.msra.mxu0 %v820
    %822 = vmatprep.subr.mxu0 0.0
    %823 = vmatpush2.msra.mxu0 0.0
    %824 = vmatprep.subr.mxu0 0.0
    %825 = vmatpush2.msra.mxu0 0.0
    %826 = vmatprep.subr.mxu0 0.0
    %827 = vmatpush2.msra.mxu0 0.0
    %828 = vmatprep.subr.mxu0 0.0
    %829 = vmatpush2.msra.mxu0 0.0
    %830 = vmatprep.subr.mxu0 0.0
    %831 = vmatpush2.msra.mxu0 0.0
    %832 = vmatprep.subr.mxu0 0.0
    %833 = vmatpush2.msra.mxu0 0.0
    %834 = vmatprep.subr.mxu0 0.0
    %835 = vmatpush2.msra.mxu0 0.0
    %836 = vmatprep.subr.mxu0 0.0
    %837 = vmatpush2.msra.mxu0 0.0
    %838 = vmatprep.subr.mxu0 0.0
    %839 = vmatpush2.msra.mxu0 0.0
    %840 = vmatprep.subr.mxu0 0.0
    %841 = vmatpush2.msra.mxu0 0.0
    %842 = vmatprep.subr.mxu0 0.0
    %843 = vmatpush2.msra.mxu0 0.0
    %844 = vmatprep.subr.mxu0 0.0
    %845 = vmatpush2.msra.mxu0 0.0
    %846 = vmatprep.subr.mxu0 0.0
    %847 = vmatpush2.msra.mxu0 0.0
    %848 = vmatprep.subr.mxu0 0.0
    %849 = vmatpush2.msra.mxu0 0.0
    %850 = vmatprep.subr.mxu0 0.0
    %851 = vmatpush2.msra.mxu0 0.0
    %852 = vmatprep.subr.mxu0 0.0
    %853 = vmatpush2.msra.mxu0 0.0
    %854 = vmatprep.mubr.f32.mxu0 0.0
    %v855 = vand.u32 %v277, 4294901760
    %856 = vmatmul.mubr.f32.gmra.mxu0 %v855
    %v857 = vpop.f32.mrf.mxu0
    %v858 = vadd.f32 %v732, %v857
    %v859 = vpop.f32.mrf.mxu0
    %v860 = vadd.f32 %v734, %v859
    %861 = vdwg.mxu0
    %862 = vmatprep.subr.mxu0 0.0
    %863 = vmatpush1.msra.mxu0 0.0
    %864 = vmatprep.subr.mxu0 0.0
    %865 = vmatpush1.msra.mxu0 0.0
    %866 = vmatprep.subr.mxu0 0.0
    %867 = vmatpush1.msra.mxu0 0.0
    %868 = vmatprep.subr.mxu0 0.0
    %869 = vmatpush1.msra.mxu0 0.0
    %870 = vmatprep.subr.mxu0 0.0
    %871 = vmatpush1.msra.mxu0 0.0
    %872 = vmatprep.subr.mxu0 0.0
    %873 = vmatpush1.msra.mxu0 0.0
    %874 = vmatprep.subr.mxu0 0.0
    %875 = vmatpush1.msra.mxu0 0.0
    %v876 = vand.u32 %v268, 4294901760
    %877 = vmatprep.subr.mxu0 %v876
    %v878 = vand.u32 %v267, 4294901760
    %879 = vmatpush1.msra.mxu0 %v878
    %v880 = vand.u32 %v266, 4294901760
    %881 = vmatprep.subr.mxu0 %v880
    %v882 = vand.u32 %v265, 4294901760
    %883 = vmatpush1.msra.mxu0 %v882
    %v884 = vand.u32 %v264, 4294901760
    %885 = vmatprep.subr.mxu0 %v884
    %v886 = vand.u32 %v263, 4294901760
    %887 = vmatpush1.msra.mxu0 %v886
    %v888 = vand.u32 %v262, 4294901760
    %889 = vmatprep.subr.mxu0 %v888
    %v890 = vand.u32 %v261, 4294901760
    %891 = vmatpush1.msra.mxu0 %v890
    %v892 = vand.u32 %v260, 4294901760
    %893 = vmatprep.subr.mxu0 %v892
    %v894 = vand.u32 %v259, 4294901760
    %895 = vmatpush1.msra.mxu0 %v894
    %v896 = vand.u32 %v258, 4294901760
    %897 = vmatprep.subr.mxu0 %v896
    %v898 = vand.u32 %v257, 4294901760
    %899 = vmatpush1.msra.mxu0 %v898
    %v900 = vand.u32 %v256, 4294901760
    %901 = vmatprep.subr.mxu0 %v900
    %v902 = vand.u32 %v255, 4294901760
    %903 = vmatpush1.msra.mxu0 %v902
    %v904 = vand.u32 %v254, 4294901760
    %905 = vmatprep.subr.mxu0 %v904
    %v906 = vand.u32 %v253, 4294901760
    %907 = vmatpush1.msra.mxu0 %v906
    %v908 = vand.u32 %v252, 4294901760
    %909 = vmatprep.subr.mxu0 %v908
    %v910 = vand.u32 %v251, 4294901760
    %911 = vmatpush1.msra.mxu0 %v910
    %912 = vmatprep.subr.mxu0 0.0
    %913 = vmatpush2.msra.mxu0 0.0
    %914 = vmatprep.subr.mxu0 0.0
    %915 = vmatpush2.msra.mxu0 0.0
    %916 = vmatprep.subr.mxu0 0.0
    %917 = vmatpush2.msra.mxu0 0.0
    %918 = vmatprep.subr.mxu0 0.0
    %919 = vmatpush2.msra.mxu0 0.0
    %920 = vmatprep.subr.mxu0 0.0
    %921 = vmatpush2.msra.mxu0 0.0
    %922 = vmatprep.subr.mxu0 0.0
    %923 = vmatpush2.msra.mxu0 0.0
    %924 = vmatprep.subr.mxu0 0.0
    %925 = vmatpush2.msra.mxu0 0.0
    %926 = vmatprep.subr.mxu0 0.0
    %927 = vmatpush2.msra.mxu0 0.0
    %928 = vmatprep.subr.mxu0 0.0
    %929 = vmatpush2.msra.mxu0 0.0
    %930 = vmatprep.subr.mxu0 0.0
    %931 = vmatpush2.msra.mxu0 0.0
    %932 = vmatprep.subr.mxu0 0.0
    %933 = vmatpush2.msra.mxu0 0.0
    %934 = vmatprep.subr.mxu0 0.0
    %935 = vmatpush2.msra.mxu0 0.0
    %936 = vmatprep.subr.mxu0 0.0
    %937 = vmatpush2.msra.mxu0 0.0
    %938 = vmatprep.subr.mxu0 0.0
    %939 = vmatpush2.msra.mxu0 0.0
    %940 = vmatprep.subr.mxu0 0.0
    %941 = vmatpush2.msra.mxu0 0.0
    %942 = vmatprep.subr.mxu0 0.0
    %943 = vmatpush2.msra.mxu0 0.0
    %944 = vmatprep.mubr.f32.mxu0 0.0
    %v945 = vand.u32 %v277, 4294901760
    %946 = vmatmul.mubr.f32.gmra.mxu0 %v945
    %v947 = vpop.f32.mrf.mxu0
    %v948 = vadd.f32 %v858, %v947
    %v949 = vpop.f32.mrf.mxu0
    %v950 = vadd.f32 %v860, %v949
    %951 = vdwg.mxu0
    %v952 = vmul.f32 %v948, 0.5
    %v953 = vmul.f32 %v950, 0.5
    %v954 = vmul.f32 %v948, 0.70710677
    %v955 = vmul.f32 %v950, 0.70710677
    %v956 = verf.f32.pop %v954
    %v957 = verf.f32.pop %v955
    %v958 = vadd.f32 %v956, 1.0
    %v959 = vadd.f32 %v957, 1.0
    %v960 = vmul.f32 %v952, %v958
    %v961 = vmul.f32 %v953, %v959
    %v962 = vld [vmem:[#allocation7] sm:$0xff]
    %963 = vst [vmem:[#allocation2 + $0x8] sm:$0xff] %v960
    %964 = vst [vmem:[#allocation2 + $0x10] sm:$0xff] %v961
    %v965 = vld [vmem:[#allocation2] sm:$0xff]
    %v966 = vld [vmem:[#allocation2 + $0x8] sm:$0xff]
    %v967 = vld [vmem:[#allocation2 + $0x10] sm:$0xff]
    %971 = vrot.lane.b32.xlu0 %v965, 17
    %v972 = vpop.permute.xlu0 %971
    %973 = vrot.lane.b32.xlu0 %v966, 17
    %v974 = vpop.permute.xlu0 %973
    %975 = vrot.lane.b32.xlu0 %v967, 17
    %v976 = vpop.permute.xlu0 %975
    %v977 = vsel %vm95, %v972, %v974
    %v978 = vsel %vm95, %v974, %v976
    %v981 = vsel %vm76, %v977, 0.0
    %v982 = vsel %vm77, %v978, 0.0
    %983 = vst [vmem:[#allocation3] sm:$0xff] %v981
    %984 = vst [vmem:[#allocation3 + $0x8] sm:$0xff] %v982
    %v985 = vld [vmem:[#allocation2] sm:$0xff]
    %v986 = vld [vmem:[#allocation2 + $0x8] sm:$0xff]
    %v987 = vld [vmem:[#allocation2 + $0x10] sm:$0xff]
    %991 = vrot.lane.b32.xlu0 %v985, 16
    %v992 = vpop.permute.xlu0 %991
    %993 = vrot.lane.b32.xlu0 %v986, 16
    %v994 = vpop.permute.xlu0 %993
    %995 = vrot.lane.b32.xlu0 %v987, 16
    %v996 = vpop.permute.xlu0 %995
    %v997 = vsel %vm116, %v992, %v994
    %v998 = vsel %vm116, %v994, %v996
    %1001 = vst [vmem:[#allocation3 + $0x10] sm:$0xff] %v997
    %1002 = vst [vmem:[#allocation3 + $0x18] sm:$0xff] %v998
    %v1003 = vld [vmem:[#allocation2] sm:$0xff]
    %v1004 = vld [vmem:[#allocation2 + $0x8] sm:$0xff]
    %v1005 = vld [vmem:[#allocation2 + $0x10] sm:$0xff]
    %1009 = vrot.lane.b32.xlu0 %v1003, 15
    %v1010 = vpop.permute.xlu0 %1009
    %1011 = vrot.lane.b32.xlu0 %v1004, 15
    %v1012 = vpop.permute.xlu0 %1011
    %1013 = vrot.lane.b32.xlu0 %v1005, 15
    %v1014 = vpop.permute.xlu0 %1013
    %v1015 = vsel %vm135, %v1010, %v1012
    %v1016 = vsel %vm135, %v1012, %v1014
    %v1019 = vsel %vm78, %v1015, 0.0
    %v1020 = vsel %vm79, %v1016, 0.0
    %1021 = vst [vmem:[#allocation3 + $0x20] sm:$0xff] %v1019
    %1022 = vst [vmem:[#allocation3 + $0x28] sm:$0xff] %v1020
    %v1023 = vld [vmem:[#allocation2] sm:$0xff]
    %v1024 = vld [vmem:[#allocation2 + $0x8] sm:$0xff]
    %v1025 = vld [vmem:[#allocation2 + $0x10] sm:$0xff]
    %1029 = vrot.lane.b32.xlu0 %v1023, 1
    %v1030 = vpop.permute.xlu0 %1029
    %1031 = vrot.lane.b32.xlu0 %v1024, 1
    %v1032 = vpop.permute.xlu0 %1031
    %1033 = vrot.lane.b32.xlu0 %v1025, 1
    %v1034 = vpop.permute.xlu0 %1033
    %v1035 = vsel %vm156, %v1030, %v1032
    %v1036 = vsel %vm156, %v1032, %v1034
    %v1039 = vsel %vm76, %v1035, 0.0
    %v1040 = vsel %vm77, %v1036, 0.0
    %1041 = vst [vmem:[#allocation3 + $0x30] sm:$0xff] %v1039
    %1042 = vst [vmem:[#allocation3 + $0x38] sm:$0xff] %v1040
    %v1043 = vld [vmem:[#allocation2 + $0x8] sm:$0xff]
    %v1044 = vld [vmem:[#allocation2 + $0x10] sm:$0xff]
    %1045 = vst [vmem:[#allocation3 + $0x40] sm:$0xff] %v1043
    %1046 = vst [vmem:[#allocation3 + $0x48] sm:$0xff] %v1044
    %v1047 = vld [vmem:[#allocation2 + $0x8] sm:$0xff]
    %v1048 = vld [vmem:[#allocation2 + $0x10] sm:$0xff]
    %v1049 = vld [vmem:[#allocation2 + $0x18] sm:$0xff]
    %1053 = vrot.lane.b32.xlu0 %v1047, 127
    %v1054 = vpop.permute.xlu0 %1053
    %1055 = vrot.lane.b32.xlu0 %v1048, 127
    %v1056 = vpop.permute.xlu0 %1055
    %1057 = vrot.lane.b32.xlu0 %v1049, 127
    %v1058 = vpop.permute.xlu0 %1057
    %v1059 = vsel %vm181, %v1054, %v1056
    %v1060 = vsel %vm181, %v1056, %v1058
    %v1063 = vsel %vm78, %v1059, 0.0
    %v1064 = vsel %vm79, %v1060, 0.0
    %1065 = vst [vmem:[#allocation3 + $0x50] sm:$0xff] %v1063
    %1066 = vst [vmem:[#allocation3 + $0x58] sm:$0xff] %v1064
    %v1067 = vld [vmem:[#allocation2 + $0x8] sm:$0xff]
    %v1068 = vld [vmem:[#allocation2 + $0x10] sm:$0xff]
    %v1069 = vld [vmem:[#allocation2 + $0x18] sm:$0xff]
    %1073 = vrot.lane.b32.xlu0 %v1067, 113
    %v1074 = vpop.permute.xlu0 %1073
    %1075 = vrot.lane.b32.xlu0 %v1068, 113
    %v1076 = vpop.permute.xlu0 %1075
    %1077 = vrot.lane.b32.xlu0 %v1069, 113
    %v1078 = vpop.permute.xlu0 %1077
    %v1079 = vsel %vm202, %v1074, %v1076
    %v1080 = vsel %vm202, %v1076, %v1078
    %v1083 = vsel %vm76, %v1079, 0.0
    %v1084 = vsel %vm77, %v1080, 0.0
    %1085 = vst [vmem:[#allocation3 + $0x60] sm:$0xff] %v1083
    %1086 = vst [vmem:[#allocation3 + $0x68] sm:$0xff] %v1084
    %v1087 = vld [vmem:[#allocation2 + $0x8] sm:$0xff]
    %v1088 = vld [vmem:[#allocation2 + $0x10] sm:$0xff]
    %v1089 = vld [vmem:[#allocation2 + $0x18] sm:$0xff]
    %1093 = vrot.lane.b32.xlu0 %v1087, 112
    %v1094 = vpop.permute.xlu0 %1093
    %1095 = vrot.lane.b32.xlu0 %v1088, 112
    %v1096 = vpop.permute.xlu0 %1095
    %1097 = vrot.lane.b32.xlu0 %v1089, 112
    %v1098 = vpop.permute.xlu0 %1097
    %v1099 = vsel %vm223, %v1094, %v1096
    %v1100 = vsel %vm223, %v1096, %v1098
    %1103 = vst [vmem:[#allocation3 + $0x70] sm:$0xff] %v1099
    %1104 = vst [vmem:[#allocation3 + $0x78] sm:$0xff] %v1100
    %v1105 = vld [vmem:[#allocation2 + $0x8] sm:$0xff]
    %v1106 = vld [vmem:[#allocation2 + $0x10] sm:$0xff]
    %v1107 = vld [vmem:[#allocation2 + $0x18] sm:$0xff]
    %1111 = vrot.lane.b32.xlu0 %v1105, 111
    %v1112 = vpop.permute.xlu0 %1111
    %1113 = vrot.lane.b32.xlu0 %v1106, 111
    %v1114 = vpop.permute.xlu0 %1113
    %1115 = vrot.lane.b32.xlu0 %v1107, 111
    %v1116 = vpop.permute.xlu0 %1115
    %v1117 = vsel %vm242, %v1112, %v1114
    %v1118 = vsel %vm242, %v1114, %v1116
    %v1121 = vsel %vm78, %v1117, 0.0
    %v1122 = vsel %vm79, %v1118, 0.0
    %1123 = vst [vmem:[#allocation3 + $0x80] sm:$0xff] %v1121
    %1124 = vst [vmem:[#allocation3 + $0x88] sm:$0xff] %v1122
    %v1125 = vld [vmem:[#allocation3] sm:$0xff]
    %v1126 = vld [vmem:[#allocation3 + $0x8] sm:$0xff]
    %v1127 = vld [vmem:[#allocation3 + $0x10] sm:$0xff]
    %v1128 = vld [vmem:[#allocation3 + $0x18] sm:$0xff]
    %v1129 = vld [vmem:[#allocation3 + $0x20] sm:$0xff]
    %v1130 = vld [vmem:[#allocation3 + $0x28] sm:$0xff]
    %v1131 = vld [vmem:[#allocation3 + $0x30] sm:$0xff]
    %v1132 = vld [vmem:[#allocation3 + $0x38] sm:$0xff]
    %v1133 = vld [vmem:[#allocation3 + $0x40] sm:$0xff]
    %v1134 = vld [vmem:[#allocation3 + $0x48] sm:$0xff]
    %v1135 = vld [vmem:[#allocation3 + $0x50] sm:$0xff]
    %v1136 = vld [vmem:[#allocation3 + $0x58] sm:$0xff]
    %v1137 = vld [vmem:[#allocation3 + $0x60] sm:$0xff]
    %v1138 = vld [vmem:[#allocation3 + $0x68] sm:$0xff]
    %v1139 = vld [vmem:[#allocation3 + $0x70] sm:$0xff]
    %v1140 = vld [vmem:[#allocation3 + $0x78] sm:$0xff]
    %v1141 = vld [vmem:[#allocation3 + $0x80] sm:$0xff]
    %v1142 = vld [vmem:[#allocation3 + $0x88] sm:$0xff]
    %v1143 = vld [vmem:[%s4] sm:$0xff]
    %1145 = vset.pattern.permute.xlu0 0
    %1146 = vperm.xlu0 %1145, %v1143
    %v1147 = vpop.permute.xlu0 %1146
    %v1150 = vsel %vm275, %v962, 0
    %1152 = vmatprep.subr.mxu0 0.0
    %1153 = vmatpush1.msra.mxu0 0.0
    %1154 = vmatprep.subr.mxu0 0.0
    %1155 = vmatpush1.msra.mxu0 0.0
    %1156 = vmatprep.subr.mxu0 0.0
    %1157 = vmatpush1.msra.mxu0 0.0
    %1158 = vmatprep.subr.mxu0 0.0
    %1159 = vmatpush1.msra.mxu0 0.0
    %1160 = vmatprep.subr.mxu0 0.0
    %1161 = vmatpush1.msra.mxu0 0.0
    %1162 = vmatprep.subr.mxu0 0.0
    %1163 = vmatpush1.msra.mxu0 0.0
    %1164 = vmatprep.subr.mxu0 0.0
    %1165 = vmatpush1.msra.mxu0 0.0
    %v1166 = vand.u32 %v1142, 4294901760
    %1167 = vmatprep.subr.mxu0 %v1166
    %v1168 = vand.u32 %v1141, 4294901760
    %1169 = vmatpush1.msra.mxu0 %v1168
    %v1170 = vand.u32 %v1140, 4294901760
    %1171 = vmatprep.subr.mxu0 %v1170
    %v1172 = vand.u32 %v1139, 4294901760
    %1173 = vmatpush1.msra.mxu0 %v1172
    %v1174 = vand.u32 %v1138, 4294901760
    %1175 = vmatprep.subr.mxu0 %v1174
    %v1176 = vand.u32 %v1137, 4294901760
    %1177 = vmatpush1.msra.mxu0 %v1176
    %v1178 = vand.u32 %v1136, 4294901760
    %1179 = vmatprep.subr.mxu0 %v1178
    %v1180 = vand.u32 %v1135, 4294901760
    %1181 = vmatpush1.msra.mxu0 %v1180
    %v1182 = vand.u32 %v1134, 4294901760
    %1183 = vmatprep.subr.mxu0 %v1182
    %v1184 = vand.u32 %v1133, 4294901760
    %1185 = vmatpush1.msra.mxu0 %v1184
    %v1186 = vand.u32 %v1132, 4294901760
    %1187 = vmatprep.subr.mxu0 %v1186
    %v1188 = vand.u32 %v1131, 4294901760
    %1189 = vmatpush1.msra.mxu0 %v1188
    %v1190 = vand.u32 %v1130, 4294901760
    %1191 = vmatprep.subr.mxu0 %v1190
    %v1192 = vand.u32 %v1129, 4294901760
    %1193 = vmatpush1.msra.mxu0 %v1192
    %v1194 = vand.u32 %v1128, 4294901760
    %1195 = vmatprep.subr.mxu0 %v1194
    %v1196 = vand.u32 %v1127, 4294901760
    %1197 = vmatpush1.msra.mxu0 %v1196
    %v1198 = vand.u32 %v1126, 4294901760
    %1199 = vmatprep.subr.mxu0 %v1198
    %v1200 = vand.u32 %v1125, 4294901760
    %1201 = vmatpush1.msra.mxu0 %v1200
    %1202 = vmatprep.subr.mxu0 0.0
    %1203 = vmatpush2.msra.mxu0 0.0
    %1204 = vmatprep.subr.mxu0 0.0
    %1205 = vmatpush2.msra.mxu0 0.0
    %1206 = vmatprep.subr.mxu0 0.0
    %1207 = vmatpush2.msra.mxu0 0.0
    %1208 = vmatprep.subr.mxu0 0.0
    %1209 = vmatpush2.msra.mxu0 0.0
    %1210 = vmatprep.subr.mxu0 0.0
    %1211 = vmatpush2.msra.mxu0 0.0
    %1212 = vmatprep.subr.mxu0 0.0
    %1213 = vmatpush2.msra.mxu0 0.0
    %1214 = vmatprep.subr.mxu0 0.0
    %1215 = vmatpush2.msra.mxu0 0.0
    %1216 = vmatprep.subr.mxu0 0.0
    %1217 = vmatpush2.msra.mxu0 0.0
    %1218 = vmatprep.subr.mxu0 0.0
    %1219 = vmatpush2.msra.mxu0 0.0
    %1220 = vmatprep.subr.mxu0 0.0
    %1221 = vmatpush2.msra.mxu0 0.0
    %1222 = vmatprep.subr.mxu0 0.0
    %1223 = vmatpush2.msra.mxu0 0.0
    %1224 = vmatprep.subr.mxu0 0.0
    %1225 = vmatpush2.msra.mxu0 0.0
    %1226 = vmatprep.subr.mxu0 0.0
    %1227 = vmatpush2.msra.mxu0 0.0
    %1228 = vmatprep.subr.mxu0 0.0
    %1229 = vmatpush2.msra.mxu0 0.0
    %1230 = vmatprep.subr.mxu0 0.0
    %1231 = vmatpush2.msra.mxu0 0.0
    %1232 = vmatprep.subr.mxu0 0.0
    %1233 = vmatpush2.msra.mxu0 0.0
    %1234 = vmatprep.mubr.f32.mxu0 0.0
    %v1235 = vand.u32 %v1150, 4294901760
    %v1236 = vsub.f32 %v1150, %v1235
    %v1237 = vand.u32 %v1236, 4294901760
    %v1238 = vsub.f32 %v1236, %v1237
    %v1239 = vand.u32 %v1238, 4294901760
    %1240 = vmatmul.mubr.f32.gmra.mxu0 %v1239
    %v1241 = vpop.f32.mrf.mxu0
    %v1242 = vadd.f32 %v1147, %v1241
    %v1243 = vpop.f32.mrf.mxu0
    %v1244 = vadd.f32 %v1147, %v1243
    %1245 = vdwg.mxu0
    %1246 = vmatprep.subr.mxu0 0.0
    %1247 = vmatpush1.msra.mxu0 0.0
    %1248 = vmatprep.subr.mxu0 0.0
    %1249 = vmatpush1.msra.mxu0 0.0
    %1250 = vmatprep.subr.mxu0 0.0
    %1251 = vmatpush1.msra.mxu0 0.0
    %1252 = vmatprep.subr.mxu0 0.0
    %1253 = vmatpush1.msra.mxu0 0.0
    %1254 = vmatprep.subr.mxu0 0.0
    %1255 = vmatpush1.msra.mxu0 0.0
    %1256 = vmatprep.subr.mxu0 0.0
    %1257 = vmatpush1.msra.mxu0 0.0
    %1258 = vmatprep.subr.mxu0 0.0
    %1259 = vmatpush1.msra.mxu0 0.0
    %v1260 = vand.u32 %v1142, 4294901760
    %v1261 = vsub.f32 %v1142, %v1260
    %v1262 = vand.u32 %v1261, 4294901760
    %v1263 = vsub.f32 %v1261, %v1262
    %v1264 = vand.u32 %v1263, 4294901760
    %1265 = vmatprep.subr.mxu0 %v1264
    %v1266 = vand.u32 %v1141, 4294901760
    %v1267 = vsub.f32 %v1141, %v1266
    %v1268 = vand.u32 %v1267, 4294901760
    %v1269 = vsub.f32 %v1267, %v1268
    %v1270 = vand.u32 %v1269, 4294901760
    %1271 = vmatpush1.msra.mxu0 %v1270
    %v1272 = vand.u32 %v1140, 4294901760
    %v1273 = vsub.f32 %v1140, %v1272
    %v1274 = vand.u32 %v1273, 4294901760
    %v1275 = vsub.f32 %v1273, %v1274
    %v1276 = vand.u32 %v1275, 4294901760
    %1277 = vmatprep.subr.mxu0 %v1276
    %v1278 = vand.u32 %v1139, 4294901760
    %v1279 = vsub.f32 %v1139, %v1278
    %v1280 = vand.u32 %v1279, 4294901760
    %v1281 = vsub.f32 %v1279, %v1280
    %v1282 = vand.u32 %v1281, 4294901760
    %1283 = vmatpush1.msra.mxu0 %v1282
    %v1284 = vand.u32 %v1138, 4294901760
    %v1285 = vsub.f32 %v1138, %v1284
    %v1286 = vand.u32 %v1285, 4294901760
    %v1287 = vsub.f32 %v1285, %v1286
    %v1288 = vand.u32 %v1287, 4294901760
    %1289 = vmatprep.subr.mxu0 %v1288
    %v1290 = vand.u32 %v1137, 4294901760
    %v1291 = vsub.f32 %v1137, %v1290
    %v1292 = vand.u32 %v1291, 4294901760
    %v1293 = vsub.f32 %v1291, %v1292
    %v1294 = vand.u32 %v1293, 4294901760
    %1295 = vmatpush1.msra.mxu0 %v1294
    %v1296 = vand.u32 %v1136, 4294901760
    %v1297 = vsub.f32 %v1136, %v1296
    %v1298 = vand.u32 %v1297, 4294901760
    %v1299 = vsub.f32 %v1297, %v1298
    %v1300 = vand.u32 %v1299, 4294901760
    %1301 = vmatprep.subr.mxu0 %v1300
    %v1302 = vand.u32 %v1135, 4294901760
    %v1303 = vsub.f32 %v1135, %v1302
    %v1304 = vand.u32 %v1303, 4294901760
    %v1305 = vsub.f32 %v1303, %v1304
    %v1306 = vand.u32 %v1305, 4294901760
    %1307 = vmatpush1.msra.mxu0 %v1306
    %v1308 = vand.u32 %v1134, 4294901760
    %v1309 = vsub.f32 %v1134, %v1308
    %v1310 = vand.u32 %v1309, 4294901760
    %v1311 = vsub.f32 %v1309, %v1310
    %v1312 = vand.u32 %v1311, 4294901760
    %1313 = vmatprep.subr.mxu0 %v1312
    %v1314 = vand.u32 %v1133, 4294901760
    %v1315 = vsub.f32 %v1133, %v1314
    %v1316 = vand.u32 %v1315, 4294901760
    %v1317 = vsub.f32 %v1315, %v1316
    %v1318 = vand.u32 %v1317, 4294901760
    %1319 = vmatpush1.msra.mxu0 %v1318
    %v1320 = vand.u32 %v1132, 4294901760
    %v1321 = vsub.f32 %v1132, %v1320
    %v1322 = vand.u32 %v1321, 4294901760
    %v1323 = vsub.f32 %v1321, %v1322
    %v1324 = vand.u32 %v1323, 4294901760
    %1325 = vmatprep.subr.mxu0 %v1324
    %v1326 = vand.u32 %v1131, 4294901760
    %v1327 = vsub.f32 %v1131, %v1326
    %v1328 = vand.u32 %v1327, 4294901760
    %v1329 = vsub.f32 %v1327, %v1328
    %v1330 = vand.u32 %v1329, 4294901760
    %1331 = vmatpush1.msra.mxu0 %v1330
    %v1332 = vand.u32 %v1130, 4294901760
    %v1333 = vsub.f32 %v1130, %v1332
    %v1334 = vand.u32 %v1333, 4294901760
    %v1335 = vsub.f32 %v1333, %v1334
    %v1336 = vand.u32 %v1335, 4294901760
    %1337 = vmatprep.subr.mxu0 %v1336
    %v1338 = vand.u32 %v1129, 4294901760
    %v1339 = vsub.f32 %v1129, %v1338
    %v1340 = vand.u32 %v1339, 4294901760
    %v1341 = vsub.f32 %v1339, %v1340
    %v1342 = vand.u32 %v1341, 4294901760
    %1343 = vmatpush1.msra.mxu0 %v1342
    %v1344 = vand.u32 %v1128, 4294901760
    %v1345 = vsub.f32 %v1128, %v1344
    %v1346 = vand.u32 %v1345, 4294901760
    %v1347 = vsub.f32 %v1345, %v1346
    %v1348 = vand.u32 %v1347, 4294901760
    %1349 = vmatprep.subr.mxu0 %v1348
    %v1350 = vand.u32 %v1127, 4294901760
    %v1351 = vsub.f32 %v1127, %v1350
    %v1352 = vand.u32 %v1351, 4294901760
    %v1353 = vsub.f32 %v1351, %v1352
    %v1354 = vand.u32 %v1353, 4294901760
    %1355 = vmatpush1.msra.mxu0 %v1354
    %v1356 = vand.u32 %v1126, 4294901760
    %v1357 = vsub.f32 %v1126, %v1356
    %v1358 = vand.u32 %v1357, 4294901760
    %v1359 = vsub.f32 %v1357, %v1358
    %v1360 = vand.u32 %v1359, 4294901760
    %1361 = vmatprep.subr.mxu0 %v1360
    %v1362 = vand.u32 %v1125, 4294901760
    %v1363 = vsub.f32 %v1125, %v1362
    %v1364 = vand.u32 %v1363, 4294901760
    %v1365 = vsub.f32 %v1363, %v1364
    %v1366 = vand.u32 %v1365, 4294901760
    %1367 = vmatpush1.msra.mxu0 %v1366
    %1368 = vmatprep.subr.mxu0 0.0
    %1369 = vmatpush2.msra.mxu0 0.0
    %1370 = vmatprep.subr.mxu0 0.0
    %1371 = vmatpush2.msra.mxu0 0.0
    %1372 = vmatprep.subr.mxu0 0.0
    %1373 = vmatpush2.msra.mxu0 0.0
    %1374 = vmatprep.subr.mxu0 0.0
    %1375 = vmatpush2.msra.mxu0 0.0
    %1376 = vmatprep.subr.mxu0 0.0
    %1377 = vmatpush2.msra.mxu0 0.0
    %1378 = vmatprep.subr.mxu0 0.0
    %1379 = vmatpush2.msra.mxu0 0.0
    %1380 = vmatprep.subr.mxu0 0.0
    %1381 = vmatpush2.msra.mxu0 0.0
    %1382 = vmatprep.subr.mxu0 0.0
    %1383 = vmatpush2.msra.mxu0 0.0
    %1384 = vmatprep.subr.mxu0 0.0
    %1385 = vmatpush2.msra.mxu0 0.0
    %1386 = vmatprep.subr.mxu0 0.0
    %1387 = vmatpush2.msra.mxu0 0.0
    %1388 = vmatprep.subr.mxu0 0.0
    %1389 = vmatpush2.msra.mxu0 0.0
    %1390 = vmatprep.subr.mxu0 0.0
    %1391 = vmatpush2.msra.mxu0 0.0
    %1392 = vmatprep.subr.mxu0 0.0
    %1393 = vmatpush2.msra.mxu0 0.0
    %1394 = vmatprep.subr.mxu0 0.0
    %1395 = vmatpush2.msra.mxu0 0.0
    %1396 = vmatprep.subr.mxu0 0.0
    %1397 = vmatpush2.msra.mxu0 0.0
    %1398 = vmatprep.subr.mxu0 0.0
    %1399 = vmatpush2.msra.mxu0 0.0
    %1400 = vmatprep.mubr.f32.mxu0 0.0
    %v1401 = vand.u32 %v1150, 4294901760
    %1402 = vmatmul.mubr.f32.gmra.mxu0 %v1401
    %v1403 = vpop.f32.mrf.mxu0
    %v1404 = vadd.f32 %v1242, %v1403
    %v1405 = vpop.f32.mrf.mxu0
    %v1406 = vadd.f32 %v1244, %v1405
    %1407 = vdwg.mxu0
    %1408 = vmatprep.subr.mxu0 0.0
    %1409 = vmatpush1.msra.mxu0 0.0
    %1410 = vmatprep.subr.mxu0 0.0
    %1411 = vmatpush1.msra.mxu0 0.0
    %1412 = vmatprep.subr.mxu0 0.0
    %1413 = vmatpush1.msra.mxu0 0.0
    %1414 = vmatprep.subr.mxu0 0.0
    %1415 = vmatpush1.msra.mxu0 0.0
    %1416 = vmatprep.subr.mxu0 0.0
    %1417 = vmatpush1.msra.mxu0 0.0
    %1418 = vmatprep.subr.mxu0 0.0
    %1419 = vmatpush1.msra.mxu0 0.0
    %1420 = vmatprep.subr.mxu0 0.0
    %1421 = vmatpush1.msra.mxu0 0.0
    %v1422 = vand.u32 %v1142, 4294901760
    %v1423 = vsub.f32 %v1142, %v1422
    %1424 = vmatprep.subr.mxu0 %v1423
    %v1425 = vand.u32 %v1141, 4294901760
    %v1426 = vsub.f32 %v1141, %v1425
    %1427 = vmatpush1.msra.mxu0 %v1426
    %v1428 = vand.u32 %v1140, 4294901760
    %v1429 = vsub.f32 %v1140, %v1428
    %1430 = vmatprep.subr.mxu0 %v1429
    %v1431 = vand.u32 %v1139, 4294901760
    %v1432 = vsub.f32 %v1139, %v1431
    %1433 = vmatpush1.msra.mxu0 %v1432
    %v1434 = vand.u32 %v1138, 4294901760
    %v1435 = vsub.f32 %v1138, %v1434
    %1436 = vmatprep.subr.mxu0 %v1435
    %v1437 = vand.u32 %v1137, 4294901760
    %v1438 = vsub.f32 %v1137, %v1437
    %1439 = vmatpush1.msra.mxu0 %v1438
    %v1440 = vand.u32 %v1136, 4294901760
    %v1441 = vsub.f32 %v1136, %v1440
    %1442 = vmatprep.subr.mxu0 %v1441
    %v1443 = vand.u32 %v1135, 4294901760
    %v1444 = vsub.f32 %v1135, %v1443
    %1445 = vmatpush1.msra.mxu0 %v1444
    %v1446 = vand.u32 %v1134, 4294901760
    %v1447 = vsub.f32 %v1134, %v1446
    %1448 = vmatprep.subr.mxu0 %v1447
    %v1449 = vand.u32 %v1133, 4294901760
    %v1450 = vsub.f32 %v1133, %v1449
    %1451 = vmatpush1.msra.mxu0 %v1450
    %v1452 = vand.u32 %v1132, 4294901760
    %v1453 = vsub.f32 %v1132, %v1452
    %1454 = vmatprep.subr.mxu0 %v1453
    %v1455 = vand.u32 %v1131, 4294901760
    %v1456 = vsub.f32 %v1131, %v1455
    %1457 = vmatpush1.msra.mxu0 %v1456
    %v1458 = vand.u32 %v1130, 4294901760
    %v1459 = vsub.f32 %v1130, %v1458
    %1460 = vmatprep.subr.mxu0 %v1459
    %v1461 = vand.u32 %v1129, 4294901760
    %v1462 = vsub.f32 %v1129, %v1461
    %1463 = vmatpush1.msra.mxu0 %v1462
    %v1464 = vand.u32 %v1128, 4294901760
    %v1465 = vsub.f32 %v1128, %v1464
    %1466 = vmatprep.subr.mxu0 %v1465
    %v1467 = vand.u32 %v1127, 4294901760
    %v1468 = vsub.f32 %v1127, %v1467
    %1469 = vmatpush1.msra.mxu0 %v1468
    %v1470 = vand.u32 %v1126, 4294901760
    %v1471 = vsub.f32 %v1126, %v1470
    %1472 = vmatprep.subr.mxu0 %v1471
    %v1473 = vand.u32 %v1125, 4294901760
    %v1474 = vsub.f32 %v1125, %v1473
    %1475 = vmatpush1.msra.mxu0 %v1474
    %1476 = vmatprep.subr.mxu0 0.0
    %1477 = vmatpush2.msra.mxu0 0.0
    %1478 = vmatprep.subr.mxu0 0.0
    %1479 = vmatpush2.msra.mxu0 0.0
    %1480 = vmatprep.subr.mxu0 0.0
    %1481 = vmatpush2.msra.mxu0 0.0
    %1482 = vmatprep.subr.mxu0 0.0
    %1483 = vmatpush2.msra.mxu0 0.0
    %1484 = vmatprep.subr.mxu0 0.0
    %1485 = vmatpush2.msra.mxu0 0.0
    %1486 = vmatprep.subr.mxu0 0.0
    %1487 = vmatpush2.msra.mxu0 0.0
    %1488 = vmatprep.subr.mxu0 0.0
    %1489 = vmatpush2.msra.mxu0 0.0
    %1490 = vmatprep.subr.mxu0 0.0
    %1491 = vmatpush2.msra.mxu0 0.0
    %1492 = vmatprep.subr.mxu0 0.0
    %1493 = vmatpush2.msra.mxu0 0.0
    %1494 = vmatprep.subr.mxu0 0.0
    %1495 = vmatpush2.msra.mxu0 0.0
    %1496 = vmatprep.subr.mxu0 0.0
    %1497 = vmatpush2.msra.mxu0 0.0
    %1498 = vmatprep.subr.mxu0 0.0
    %1499 = vmatpush2.msra.mxu0 0.0
    %1500 = vmatprep.subr.mxu0 0.0
    %1501 = vmatpush2.msra.mxu0 0.0
    %1502 = vmatprep.subr.mxu0 0.0
    %1503 = vmatpush2.msra.mxu0 0.0
    %1504 = vmatprep.subr.mxu0 0.0
    %1505 = vmatpush2.msra.mxu0 0.0
    %1506 = vmatprep.subr.mxu0 0.0
    %1507 = vmatpush2.msra.mxu0 0.0
    %1508 = vmatprep.mubr.f32.mxu0 0.0
    %v1509 = vand.u32 %v1150, 4294901760
    %v1510 = vsub.f32 %v1150, %v1509
    %1511 = vmatmul.mubr.f32.gmra.mxu0 %v1510
    %v1512 = vpop.f32.mrf.mxu0
    %v1513 = vadd.f32 %v1404, %v1512
    %v1514 = vpop.f32.mrf.mxu0
    %v1515 = vadd.f32 %v1406, %v1514
    %1516 = vdwg.mxu0
    %1517 = vmatprep.subr.mxu0 0.0
    %1518 = vmatpush1.msra.mxu0 0.0
    %1519 = vmatprep.subr.mxu0 0.0
    %1520 = vmatpush1.msra.mxu0 0.0
    %1521 = vmatprep.subr.mxu0 0.0
    %1522 = vmatpush1.msra.mxu0 0.0
    %1523 = vmatprep.subr.mxu0 0.0
    %1524 = vmatpush1.msra.mxu0 0.0
    %1525 = vmatprep.subr.mxu0 0.0
    %1526 = vmatpush1.msra.mxu0 0.0
    %1527 = vmatprep.subr.mxu0 0.0
    %1528 = vmatpush1.msra.mxu0 0.0
    %1529 = vmatprep.subr.mxu0 0.0
    %1530 = vmatpush1.msra.mxu0 0.0
    %v1531 = vand.u32 %v1142, 4294901760
    %1532 = vmatprep.subr.mxu0 %v1531
    %v1533 = vand.u32 %v1141, 4294901760
    %1534 = vmatpush1.msra.mxu0 %v1533
    %v1535 = vand.u32 %v1140, 4294901760
    %1536 = vmatprep.subr.mxu0 %v1535
    %v1537 = vand.u32 %v1139, 4294901760
    %1538 = vmatpush1.msra.mxu0 %v1537
    %v1539 = vand.u32 %v1138, 4294901760
    %1540 = vmatprep.subr.mxu0 %v1539
    %v1541 = vand.u32 %v1137, 4294901760
    %1542 = vmatpush1.msra.mxu0 %v1541
    %v1543 = vand.u32 %v1136, 4294901760
    %1544 = vmatprep.subr.mxu0 %v1543
    %v1545 = vand.u32 %v1135, 4294901760
    %1546 = vmatpush1.msra.mxu0 %v1545
    %v1547 = vand.u32 %v1134, 4294901760
    %1548 = vmatprep.subr.mxu0 %v1547
    %v1549 = vand.u32 %v1133, 4294901760
    %1550 = vmatpush1.msra.mxu0 %v1549
    %v1551 = vand.u32 %v1132, 4294901760
    %1552 = vmatprep.subr.mxu0 %v1551
    %v1553 = vand.u32 %v1131, 4294901760
    %1554 = vmatpush1.msra.mxu0 %v1553
    %v1555 = vand.u32 %v1130, 4294901760
    %1556 = vmatprep.subr.mxu0 %v1555
    %v1557 = vand.u32 %v1129, 4294901760
    %1558 = vmatpush1.msra.mxu0 %v1557
    %v1559 = vand.u32 %v1128, 4294901760
    %1560 = vmatprep.subr.mxu0 %v1559
    %v1561 = vand.u32 %v1127, 4294901760
    %1562 = vmatpush1.msra.mxu0 %v1561
    %v1563 = vand.u32 %v1126, 4294901760
    %1564 = vmatprep.subr.mxu0 %v1563
    %v1565 = vand.u32 %v1125, 4294901760
    %1566 = vmatpush1.msra.mxu0 %v1565
    %1567 = vmatprep.subr.mxu0 0.0
    %1568 = vmatpush2.msra.mxu0 0.0
    %1569 = vmatprep.subr.mxu0 0.0
    %1570 = vmatpush2.msra.mxu0 0.0
    %1571 = vmatprep.subr.mxu0 0.0
    %1572 = vmatpush2.msra.mxu0 0.0
    %1573 = vmatprep.subr.mxu0 0.0
    %1574 = vmatpush2.msra.mxu0 0.0
    %1575 = vmatprep.subr.mxu0 0.0
    %1576 = vmatpush2.msra.mxu0 0.0
    %1577 = vmatprep.subr.mxu0 0.0
    %1578 = vmatpush2.msra.mxu0 0.0
    %1579 = vmatprep.subr.mxu0 0.0
    %1580 = vmatpush2.msra.mxu0 0.0
    %1581 = vmatprep.subr.mxu0 0.0
    %1582 = vmatpush2.msra.mxu0 0.0
    %1583 = vmatprep.subr.mxu0 0.0
    %1584 = vmatpush2.msra.mxu0 0.0
    %1585 = vmatprep.subr.mxu0 0.0
    %1586 = vmatpush2.msra.mxu0 0.0
    %1587 = vmatprep.subr.mxu0 0.0
    %1588 = vmatpush2.msra.mxu0 0.0
    %1589 = vmatprep.subr.mxu0 0.0
    %1590 = vmatpush2.msra.mxu0 0.0
    %1591 = vmatprep.subr.mxu0 0.0
    %1592 = vmatpush2.msra.mxu0 0.0
    %1593 = vmatprep.subr.mxu0 0.0
    %1594 = vmatpush2.msra.mxu0 0.0
    %1595 = vmatprep.subr.mxu0 0.0
    %1596 = vmatpush2.msra.mxu0 0.0
    %1597 = vmatprep.subr.mxu0 0.0
    %1598 = vmatpush2.msra.mxu0 0.0
    %1599 = vmatprep.mubr.f32.mxu0 0.0
    %v1600 = vand.u32 %v1150, 4294901760
    %v1601 = vsub.f32 %v1150, %v1600
    %v1602 = vand.u32 %v1601, 4294901760
    %1603 = vmatmul.mubr.f32.gmra.mxu0 %v1602
    %v1604 = vpop.f32.mrf.mxu0
    %v1605 = vadd.f32 %v1513, %v1604
    %v1606 = vpop.f32.mrf.mxu0
    %v1607 = vadd.f32 %v1515, %v1606
    %1608 = vdwg.mxu0
    %1609 = vmatprep.subr.mxu0 0.0
    %1610 = vmatpush1.msra.mxu0 0.0
    %1611 = vmatprep.subr.mxu0 0.0
    %1612 = vmatpush1.msra.mxu0 0.0
    %1613 = vmatprep.subr.mxu0 0.0
    %1614 = vmatpush1.msra.mxu0 0.0
    %1615 = vmatprep.subr.mxu0 0.0
    %1616 = vmatpush1.msra.mxu0 0.0
    %1617 = vmatprep.subr.mxu0 0.0
    %1618 = vmatpush1.msra.mxu0 0.0
    %1619 = vmatprep.subr.mxu0 0.0
    %1620 = vmatpush1.msra.mxu0 0.0
    %1621 = vmatprep.subr.mxu0 0.0
    %1622 = vmatpush1.msra.mxu0 0.0
    %v1623 = vand.u32 %v1142, 4294901760
    %v1624 = vsub.f32 %v1142, %v1623
    %v1625 = vand.u32 %v1624, 4294901760
    %1626 = vmatprep.subr.mxu0 %v1625
    %v1627 = vand.u32 %v1141, 4294901760
    %v1628 = vsub.f32 %v1141, %v1627
    %v1629 = vand.u32 %v1628, 4294901760
    %1630 = vmatpush1.msra.mxu0 %v1629
    %v1631 = vand.u32 %v1140, 4294901760
    %v1632 = vsub.f32 %v1140, %v1631
    %v1633 = vand.u32 %v1632, 4294901760
    %1634 = vmatprep.subr.mxu0 %v1633
    %v1635 = vand.u32 %v1139, 4294901760
    %v1636 = vsub.f32 %v1139, %v1635
    %v1637 = vand.u32 %v1636, 4294901760
    %1638 = vmatpush1.msra.mxu0 %v1637
    %v1639 = vand.u32 %v1138, 4294901760
    %v1640 = vsub.f32 %v1138, %v1639
    %v1641 = vand.u32 %v1640, 4294901760
    %1642 = vmatprep.subr.mxu0 %v1641
    %v1643 = vand.u32 %v1137, 4294901760
    %v1644 = vsub.f32 %v1137, %v1643
    %v1645 = vand.u32 %v1644, 4294901760
    %1646 = vmatpush1.msra.mxu0 %v1645
    %v1647 = vand.u32 %v1136, 4294901760
    %v1648 = vsub.f32 %v1136, %v1647
    %v1649 = vand.u32 %v1648, 4294901760
    %1650 = vmatprep.subr.mxu0 %v1649
    %v1651 = vand.u32 %v1135, 4294901760
    %v1652 = vsub.f32 %v1135, %v1651
    %v1653 = vand.u32 %v1652, 4294901760
    %1654 = vmatpush1.msra.mxu0 %v1653
    %v1655 = vand.u32 %v1134, 4294901760
    %v1656 = vsub.f32 %v1134, %v1655
    %v1657 = vand.u32 %v1656, 4294901760
    %1658 = vmatprep.subr.mxu0 %v1657
    %v1659 = vand.u32 %v1133, 4294901760
    %v1660 = vsub.f32 %v1133, %v1659
    %v1661 = vand.u32 %v1660, 4294901760
    %1662 = vmatpush1.msra.mxu0 %v1661
    %v1663 = vand.u32 %v1132, 4294901760
    %v1664 = vsub.f32 %v1132, %v1663
    %v1665 = vand.u32 %v1664, 4294901760
    %1666 = vmatprep.subr.mxu0 %v1665
    %v1667 = vand.u32 %v1131, 4294901760
    %v1668 = vsub.f32 %v1131, %v1667
    %v1669 = vand.u32 %v1668, 4294901760
    %1670 = vmatpush1.msra.mxu0 %v1669
    %v1671 = vand.u32 %v1130, 4294901760
    %v1672 = vsub.f32 %v1130, %v1671
    %v1673 = vand.u32 %v1672, 4294901760
    %1674 = vmatprep.subr.mxu0 %v1673
    %v1675 = vand.u32 %v1129, 4294901760
    %v1676 = vsub.f32 %v1129, %v1675
    %v1677 = vand.u32 %v1676, 4294901760
    %1678 = vmatpush1.msra.mxu0 %v1677
    %v1679 = vand.u32 %v1128, 4294901760
    %v1680 = vsub.f32 %v1128, %v1679
    %v1681 = vand.u32 %v1680, 4294901760
    %1682 = vmatprep.subr.mxu0 %v1681
    %v1683 = vand.u32 %v1127, 4294901760
    %v1684 = vsub.f32 %v1127, %v1683
    %v1685 = vand.u32 %v1684, 4294901760
    %1686 = vmatpush1.msra.mxu0 %v1685
    %v1687 = vand.u32 %v1126, 4294901760
    %v1688 = vsub.f32 %v1126, %v1687
    %v1689 = vand.u32 %v1688, 4294901760
    %1690 = vmatprep.subr.mxu0 %v1689
    %v1691 = vand.u32 %v1125, 4294901760
    %v1692 = vsub.f32 %v1125, %v1691
    %v1693 = vand.u32 %v1692, 4294901760
    %1694 = vmatpush1.msra.mxu0 %v1693
    %1695 = vmatprep.subr.mxu0 0.0
    %1696 = vmatpush2.msra.mxu0 0.0
    %1697 = vmatprep.subr.mxu0 0.0
    %1698 = vmatpush2.msra.mxu0 0.0
    %1699 = vmatprep.subr.mxu0 0.0
    %1700 = vmatpush2.msra.mxu0 0.0
    %1701 = vmatprep.subr.mxu0 0.0
    %1702 = vmatpush2.msra.mxu0 0.0
    %1703 = vmatprep.subr.mxu0 0.0
    %1704 = vmatpush2.msra.mxu0 0.0
    %1705 = vmatprep.subr.mxu0 0.0
    %1706 = vmatpush2.msra.mxu0 0.0
    %1707 = vmatprep.subr.mxu0 0.0
    %1708 = vmatpush2.msra.mxu0 0.0
    %1709 = vmatprep.subr.mxu0 0.0
    %1710 = vmatpush2.msra.mxu0 0.0
    %1711 = vmatprep.subr.mxu0 0.0
    %1712 = vmatpush2.msra.mxu0 0.0
    %1713 = vmatprep.subr.mxu0 0.0
    %1714 = vmatpush2.msra.mxu0 0.0
    %1715 = vmatprep.subr.mxu0 0.0
    %1716 = vmatpush2.msra.mxu0 0.0
    %1717 = vmatprep.subr.mxu0 0.0
    %1718 = vmatpush2.msra.mxu0 0.0
    %1719 = vmatprep.subr.mxu0 0.0
    %1720 = vmatpush2.msra.mxu0 0.0
    %1721 = vmatprep.subr.mxu0 0.0
    %1722 = vmatpush2.msra.mxu0 0.0
    %1723 = vmatprep.subr.mxu0 0.0
    %1724 = vmatpush2.msra.mxu0 0.0
    %1725 = vmatprep.subr.mxu0 0.0
    %1726 = vmatpush2.msra.mxu0 0.0
    %1727 = vmatprep.mubr.f32.mxu0 0.0
    %v1728 = vand.u32 %v1150, 4294901760
    %1729 = vmatmul.mubr.f32.gmra.mxu0 %v1728
    %v1730 = vpop.f32.mrf.mxu0
    %v1731 = vadd.f32 %v1605, %v1730
    %v1732 = vpop.f32.mrf.mxu0
    %v1733 = vadd.f32 %v1607, %v1732
    %1734 = vdwg.mxu0
    %1735 = vmatprep.subr.mxu0 0.0
    %1736 = vmatpush1.msra.mxu0 0.0
    %1737 = vmatprep.subr.mxu0 0.0
    %1738 = vmatpush1.msra.mxu0 0.0
    %1739 = vmatprep.subr.mxu0 0.0
    %1740 = vmatpush1.msra.mxu0 0.0
    %1741 = vmatprep.subr.mxu0 0.0
    %1742 = vmatpush1.msra.mxu0 0.0
    %1743 = vmatprep.subr.mxu0 0.0
    %1744 = vmatpush1.msra.mxu0 0.0
    %1745 = vmatprep.subr.mxu0 0.0
    %1746 = vmatpush1.msra.mxu0 0.0
    %1747 = vmatprep.subr.mxu0 0.0
    %1748 = vmatpush1.msra.mxu0 0.0
    %v1749 = vand.u32 %v1142, 4294901760
    %1750 = vmatprep.subr.mxu0 %v1749
    %v1751 = vand.u32 %v1141, 4294901760
    %1752 = vmatpush1.msra.mxu0 %v1751
    %v1753 = vand.u32 %v1140, 4294901760
    %1754 = vmatprep.subr.mxu0 %v1753
    %v1755 = vand.u32 %v1139, 4294901760
    %1756 = vmatpush1.msra.mxu0 %v1755
    %v1757 = vand.u32 %v1138, 4294901760
    %1758 = vmatprep.subr.mxu0 %v1757
    %v1759 = vand.u32 %v1137, 4294901760
    %1760 = vmatpush1.msra.mxu0 %v1759
    %v1761 = vand.u32 %v1136, 4294901760
    %1762 = vmatprep.subr.mxu0 %v1761
    %v1763 = vand.u32 %v1135, 4294901760
    %1764 = vmatpush1.msra.mxu0 %v1763
    %v1765 = vand.u32 %v1134, 4294901760
    %1766 = vmatprep.subr.mxu0 %v1765
    %v1767 = vand.u32 %v1133, 4294901760
    %1768 = vmatpush1.msra.mxu0 %v1767
    %v1769 = vand.u32 %v1132, 4294901760
    %1770 = vmatprep.subr.mxu0 %v1769
    %v1771 = vand.u32 %v1131, 4294901760
    %1772 = vmatpush1.msra.mxu0 %v1771
    %v1773 = vand.u32 %v1130, 4294901760
    %1774 = vmatprep.subr.mxu0 %v1773
    %v1775 = vand.u32 %v1129, 4294901760
    %1776 = vmatpush1.msra.mxu0 %v1775
    %v1777 = vand.u32 %v1128, 4294901760
    %1778 = vmatprep.subr.mxu0 %v1777
    %v1779 = vand.u32 %v1127, 4294901760
    %1780 = vmatpush1.msra.mxu0 %v1779
    %v1781 = vand.u32 %v1126, 4294901760
    %1782 = vmatprep.subr.mxu0 %v1781
    %v1783 = vand.u32 %v1125, 4294901760
    %1784 = vmatpush1.msra.mxu0 %v1783
    %1785 = vmatprep.subr.mxu0 0.0
    %1786 = vmatpush2.msra.mxu0 0.0
    %1787 = vmatprep.subr.mxu0 0.0
    %1788 = vmatpush2.msra.mxu0 0.0
    %1789 = vmatprep.subr.mxu0 0.0
    %1790 = vmatpush2.msra.mxu0 0.0
    %1791 = vmatprep.subr.mxu0 0.0
    %1792 = vmatpush2.msra.mxu0 0.0
    %1793 = vmatprep.subr.mxu0 0.0
    %1794 = vmatpush2.msra.mxu0 0.0
    %1795 = vmatprep.subr.mxu0 0.0
    %1796 = vmatpush2.msra.mxu0 0.0
    %1797 = vmatprep.subr.mxu0 0.0
    %1798 = vmatpush2.msra.mxu0 0.0
    %1799 = vmatprep.subr.mxu0 0.0
    %1800 = vmatpush2.msra.mxu0 0.0
    %1801 = vmatprep.subr.mxu0 0.0
    %1802 = vmatpush2.msra.mxu0 0.0
    %1803 = vmatprep.subr.mxu0 0.0
    %1804 = vmatpush2.msra.mxu0 0.0
    %1805 = vmatprep.subr.mxu0 0.0
    %1806 = vmatpush2.msra.mxu0 0.0
    %1807 = vmatprep.subr.mxu0 0.0
    %1808 = vmatpush2.msra.mxu0 0.0
    %1809 = vmatprep.subr.mxu0 0.0
    %1810 = vmatpush2.msra.mxu0 0.0
    %1811 = vmatprep.subr.mxu0 0.0
    %1812 = vmatpush2.msra.mxu0 0.0
    %1813 = vmatprep.subr.mxu0 0.0
    %1814 = vmatpush2.msra.mxu0 0.0
    %1815 = vmatprep.subr.mxu0 0.0
    %1816 = vmatpush2.msra.mxu0 0.0
    %1817 = vmatprep.mubr.f32.mxu0 0.0
    %v1818 = vand.u32 %v1150, 4294901760
    %1819 = vmatmul.mubr.f32.gmra.mxu0 %v1818
    %v1820 = vpop.f32.mrf.mxu0
    %v1821 = vadd.f32 %v1731, %v1820
    %v1822 = vpop.f32.mrf.mxu0
    %v1823 = vadd.f32 %v1733, %v1822
    %1824 = vdwg.mxu0
    %v1825 = vadd.f32 %v1821, %v45
    %v1826 = vadd.f32 %v1823, %v46
    %v1827 = vmul.f32 %v1825, 0.5
    %v1828 = vmul.f32 %v1826, 0.5
    %v1829 = vmul.f32 %v1825, 0.70710677
    %v1830 = vmul.f32 %v1826, 0.70710677
    %v1831 = verf.f32.pop %v1829
    %v1832 = verf.f32.pop %v1830
    %v1833 = vadd.f32 %v1831, 1.0
    %v1834 = vadd.f32 %v1832, 1.0
    %v1835 = vmul.f32 %v1827, %v1833
    %v1836 = vmul.f32 %v1828, %v1834
    %1837 = vst [vmem:[#allocation9] sm:$0xff] %v1835
    %1838 = vst [vmem:[#allocation9 + $0x8] sm:$0xff] %v1836
    // Predicated region
    $region30: #{tpu_custom_call.1} parent=1 // pred_check
      _
    $region31: #{tpu_custom_call.1} parent=1 // pred_check_branch
      %1840 = sbr.rel (0) target = $region33
    $region32: #{tpu_custom_call.1} parent=1 // pred_region
      %s1842 = ssub.s32 256, 256
      %1843 = vsyncadd [#allocation6], %s1842
      %s1845 = sshll.u32 [#allocation9], 4
      %s1846 = int_to_ptr.vmem [resolvable:$true] %s1845
      %1848 = dma.vmem_to_hbm [thread:$0]  %s1846, 256, %s5, [#allocation6]
    $region33: #{tpu_custom_call.1} parent=1 // pred_fallthru
      _
    // Predicated region
    $region34: #{tpu_custom_call.1} parent=1 // pred_check
      _
    $region35: #{tpu_custom_call.1} parent=1 // pred_check_branch
      %1850 = sbr.rel (0) target = $region37
    $region36: #{tpu_custom_call.1} parent=1 // pred_region
      %1851 = dma.done [#allocation6], 256
    $region37: #{tpu_custom_call.1} parent=1 // pred_fallthru
      _
    %1852 = vsyncpa [#allocation5], 1
    %1853 = vsyncpa [#allocation8], 1
    %1854 = vsyncpa [#allocation6], 1

</llo_original>
